<compile_context>
chip_gen: v5e
topology: v5e:2x2
jax: 0.10.0
libtpu: 0.0.40
codegen_flags: <defaults>
</compile_context>

<pallas_src>
import functools

import numpy as np
import jax
import jax.numpy as jnp
from jax.experimental import pallas as pl
from jax.experimental.pallas import tpu as pltpu

_EPS = 1e-5
_C = 128   # lane-dense channel width for layer 1-3 activations
_XW = 8    # padded layer-1 x-channel width (real in_channels <= 8)


def _round_up(x, m):
    return (x + m - 1) // m * m


# ----------------------------- fused kernel ---------------------------------
def _unet_fused_kernel(t_ref, freq_ref, wlin_ref, bt_ref,
                       x3_ref, w1x_ref, w1t_ref, w4_ref, gb_ref, aux_ref,
                       w23_hbm,
                       o_ref,
                       w23_buf, w23_sem, *, n_real, rows):
    dot = functools.partial(jnp.dot, preferred_element_type=jnp.float32)
    bf16 = jnp.bfloat16

    # Prefetch layer-2/3 weights HBM -> VMEM while the time MLP / layer 1 run.
    w23_cp = pltpu.make_async_copy(w23_hbm, w23_buf, w23_sem)
    w23_cp.start()

    aux = aux_ref[...]                 # (R,16): [sel(8) | rmask | fmask | lmask | 0]
    sel = aux[:, 0:8]                  # one-hot row -> batch selector
    rmask = aux[:, 8:9]                # 1 on real rows, 0 on halo rows
    fmask = aux[:, 9:10]               # 1 where l == 0
    lmask = aux[:, 10:11]              # 1 where l == L-1
    gb = gb_ref[...]                   # (8,128): g1,be1,g2,be2,g3,be3,b4,0

    # ---- time embedding: sinusoidal + Linear + ReLU ----
    emb = t_ref[...] * freq_ref[...]                              # (Bp, half)
    sc = jnp.concatenate([jnp.sin(emb), jnp.cos(emb)], axis=1)    # (Bp, 2*half)
    temb = jnp.maximum(dot(sc.astype(bf16), wlin_ref[...]) + bt_ref[...], 0.0)

    def shift3(h):
        # [h[r-1] | h[r] | h[r+1]] for the fused-tap matmul.  Zero halo rows
        # between batch blocks make the roll wrap-around land on zeros.
        hm = pltpu.roll(h, 1, axis=0)
        hp = pltpu.roll(h, rows - 1, axis=0)
        return jnp.concatenate([hm, h, hp], axis=1).astype(bf16)

    def bn_relu(y, g, be):
        # BatchNorm1d (training mode, biased var) + ReLU over the real rows.
        y = y * rmask                                   # zero halo rows
        mean = jnp.sum(y, axis=0, keepdims=True) * (1.0 / n_real)
        ex2 = jnp.sum(y * y, axis=0, keepdims=True) * (1.0 / n_real)
        var = jnp.maximum(ex2 - mean * mean, 0.0)       # cancellation-safe
        yn = (y - mean) * jax.lax.rsqrt(var + _EPS) * g + be
        return jnp.maximum(yn, 0.0) * rmask             # keep halo rows zero

    # ---- layer 1: host-preshifted x taps + L-invariant temb contribution ----
    y1 = dot(x3_ref[...].astype(bf16), w1x_ref[...])              # (R, 128)
    ct = dot(temb.astype(bf16), w1t_ref[...])                     # (Bp, 384) = [csum|c0|c2]
    tc = dot(sel, ct)                                             # (R, 384) per-row bcast
    y1 = (y1 + tc[:, 0:_C]
          - fmask * tc[:, _C:2 * _C]                              # l == 0: drop k=0 tap
          - lmask * tc[:, 2 * _C:3 * _C])                         # l == L-1: drop k=2 tap
    h = bn_relu(y1, gb[0:1, :], gb[1:2, :])

    w23_cp.wait()                                                 # w2/w3 now in VMEM

    # ---- layers 2-4: one fused-tap bf16 matmul each ----
    h = bn_relu(dot(shift3(h), w23_buf[0]), gb[2:3, :], gb[3:4, :])
    h = bn_relu(dot(shift3(h), w23_buf[1]), gb[4:5, :], gb[5:6, :])
    o_ref[...] = dot(shift3(h), w4_ref[...]) + gb[6:7, 0:o_ref.shape[1]]


# --------------------- parameters (PyTorch layouts) --------------------------
def init_params(key, in_channels, out_channels, n_feat=64, time_emb_dim=256):
    half = time_emb_dim // 2
    freqs = jnp.exp(jnp.arange(half, dtype=jnp.float32)
                    * (-float(np.log(10000.0)) / (half - 1))).reshape(1, half)
    ks = jax.random.split(key, 16)

    def nrm(k, shape, scale=0.05):
        return scale * jax.random.normal(k, shape, jnp.float32)

    c1_in = in_channels + time_emb_dim
    return {
        "freqs": freqs,
        # nn.Linear: weight (out, in), bias (out,)
        "lin_w": nrm(ks[0], (time_emb_dim, time_emb_dim)),
        "lin_b": nrm(ks[1], (time_emb_dim,)),
        # nn.Conv1d: weight (Cout, Cin, K)
        "w1": nrm(ks[2], (n_feat, c1_in, 3)), "b1": nrm(ks[3], (n_feat,)),
        "g1": 1.0 + 0.1 * jax.random.normal(ks[4], (n_feat,), jnp.float32),
        "be1": nrm(ks[5], (n_feat,), 0.1),
        "w2": nrm(ks[6], (2 * n_feat, n_feat, 3)), "b2": nrm(ks[7], (2 * n_feat,)),
        "g2": 1.0 + 0.1 * jax.random.normal(ks[8], (2 * n_feat,), jnp.float32),
        "be2": nrm(ks[9], (2 * n_feat,), 0.1),
        # nn.ConvTranspose1d: weight (Cin, Cout, K)
        "w3": nrm(ks[10], (2 * n_feat, n_feat, 3)), "b3": nrm(ks[11], (n_feat,)),
        "g3": 1.0 + 0.1 * jax.random.normal(ks[12], (n_feat,), jnp.float32),
        "be3": nrm(ks[13], (n_feat,), 0.1),
        "w4": nrm(ks[14], (n_feat, out_channels, 3)), "b4": nrm(ks[15], (out_channels,)),
    }


def pack_params(raw, in_channels, out_channels, n_feat, time_emb_dim):
    """PyTorch-layout params -> kernel layout: tap-stacked (3*Cin_p, Cout_p)
    bf16 weights, fused time-embedding weight, packed f32 scale/bias table."""
    assert in_channels <= _XW and 2 * n_feat <= _C and time_emb_dim % 2 == 0
    bf16 = jnp.bfloat16

    def conv_w_to_kio(w):        # nn.Conv1d (Cout, Cin, K) -> (K, Cin, Cout)
        return jnp.transpose(w, (2, 1, 0))

    def convT_w_to_kio(w):       # nn.ConvTranspose1d (Cin, Cout, K) -> equiv conv
        return jnp.flip(jnp.transpose(w, (2, 0, 1)), axis=0)

    def stack_taps(w_kio, cin_p, cout_p):   # -> (3*cin_p, cout_p) bf16
        k, ci, co = w_kio.shape
        out = jnp.zeros((k * cin_p, cout_p), jnp.float32)
        for j in range(k):
            out = out.at[j * cin_p:j * cin_p + ci, :co].set(w_kio[j])
        return out.astype(bf16)

    cout4 = max(8, _round_up(out_channels, 8))

    w1 = conv_w_to_kio(raw["w1"])                         # (3, cin+D, n_feat)
    w1t_kio = w1[:, in_channels:, :]                      # (3, D, n_feat)
    w1t = jnp.zeros((time_emb_dim, 3 * _C), jnp.float32)
    w1t = w1t.at[:, 0:n_feat].set(w1t_kio[0] + w1t_kio[1] + w1t_kio[2])
    w1t = w1t.at[:, _C:_C + n_feat].set(w1t_kio[0])
    w1t = w1t.at[:, 2 * _C:2 * _C + n_feat].set(w1t_kio[2])

    gb = jnp.zeros((8, _C), jnp.float32)
    gb = gb.at[0, :n_feat].set(raw["g1"]).at[1, :n_feat].set(raw["be1"])
    gb = gb.at[2, :2 * n_feat].set(raw["g2"]).at[3, :2 * n_feat].set(raw["be2"])
    gb = gb.at[4, :n_feat].set(raw["g3"]).at[5, :n_feat].set(raw["be3"])
    gb = gb.at[6, :out_channels].set(raw["b4"])

    w23 = jnp.stack([stack_taps(conv_w_to_kio(raw["w2"]), _C, _C),
                     stack_taps(convT_w_to_kio(raw["w3"]), _C, _C)])

    return {
        "freqs": raw["freqs"],                                   # (1, half) f32
        "wlin": raw["lin_w"].T.astype(bf16),                     # (D, D) bf16
        "bt": raw["lin_b"].reshape(1, -1),                       # (1, D) f32
        "w1x": stack_taps(w1[:, :in_channels, :], _XW, _C),      # (24, 128) bf16
        "w1t": w1t.astype(bf16),                                 # (D, 384) bf16
        "w23": w23,                                              # (2, 384, 128) bf16
        "w4": stack_taps(convT_w_to_kio(raw["w4"]), _C, cout4),  # (384, 8) bf16
        "gb": gb,                                                # (8, 128) f32
        # conv biases b1/b2/b3 dropped: cancelled exactly by BN mean subtraction.
    }


# ------------------------------- forward -------------------------------------
def unet_forward(kp, x_ncl, t, *, out_channels):
    B, cin, L = x_ncl.shape
    assert B <= 8 and cin <= _XW
    Lp = _round_up(L + 1, 8)          # 8-aligned per-batch block, >=1 zero halo row
    R = B * Lp
    Bp = 8
    cout4 = kp["w4"].shape[1]

    # static row-structure constants, packed into ONE tiny aux array
    l_idx = np.tile(np.arange(Lp), B)
    b_idx = np.repeat(np.arange(B), Lp)
    aux = np.zeros((R, 16), np.float32)
    aux[np.arange(R), b_idx] = 1.0                 # sel (cols 0..7)
    aux[:, 8] = (l_idx < L)                        # rmask
    aux[:, 9] = (l_idx == 0)                       # fmask
    aux[:, 10] = (l_idx == L - 1)                  # lmask
    aux = jnp.asarray(aux)

    # host-side layout plumbing: x is tiny, so pre-shift its 3 conv taps into
    # lanes [x[l-1] | x[l] | x[l+1]] (8 lanes each), zero halo rows included.
    xt = jnp.transpose(x_ncl, (0, 2, 1)).astype(jnp.float32)        # (B, L, cin)
    x3 = jnp.zeros((B, Lp, 3 * _XW), jnp.float32)
    x3 = x3.at[:, 1:L, 0:cin].set(xt[:, :L - 1])                    # x[l-1]
    x3 = x3.at[:, 0:L, _XW:_XW + cin].set(xt)                       # x[l]
    x3 = x3.at[:, 0:L - 1, 2 * _XW:2 * _XW + cin].set(xt[:, 1:])    # x[l+1]
    x3 = x3.reshape(R, 3 * _XW)

    t2 = jnp.zeros((Bp, 1), jnp.float32).at[:B, 0].set(t.astype(jnp.float32))

    kern = functools.partial(_unet_fused_kernel, n_real=float(B * L), rows=R)
    vmem = pl.BlockSpec(memory_space=pltpu.MemorySpace.VMEM)
    out_slab = pl.pallas_call(
        kern,
        out_shape=jax.ShapeDtypeStruct((R, cout4), jnp.float32),
        in_specs=[vmem] * 10 + [pl.BlockSpec(memory_space=pl.ANY)],
        out_specs=vmem,
        scratch_shapes=[pltpu.VMEM((2, 3 * _C, _C), jnp.bfloat16),   # w2/w3 landing buf
                        pltpu.SemaphoreType.DMA(())],
    )(t2, kp["freqs"], kp["wlin"], kp["bt"],
      x3, kp["w1x"], kp["w1t"], kp["w4"], kp["gb"], aux,
      kp["w23"])

    out = out_slab.reshape(B, Lp, cout4)[:, :L, :out_channels]
    return jnp.transpose(out, (0, 2, 1))                  # back to NCL


# --------------- pure-JAX reference (PyTorch semantics, f32) -----------------
def ref_forward(raw, x_ncl, t):
    B, _, L = x_ncl.shape
    hi = jax.lax.Precision.HIGHEST

    emb = t[:, None].astype(jnp.float32) * raw["freqs"]
    sincos = jnp.concatenate([jnp.sin(emb), jnp.cos(emb)], axis=-1)
    temb = jnp.maximum(jnp.dot(sincos, raw["lin_w"].T, precision=hi)
                       + raw["lin_b"], 0.0)
    D = temb.shape[-1]
    h = jnp.concatenate(
        [x_ncl, jnp.broadcast_to(temb[:, :, None], (B, D, L))], axis=1)

    def conv1d(h, w, b):                     # nn.Conv1d, k=3, pad=1
        hp = jnp.pad(h, ((0, 0), (0, 0), (1, 1)))
        y = sum(jnp.einsum("bcl,oc->bol", hp[:, :, k:k + L], w[:, :, k],
                           precision=hi) for k in range(3))
        return y + b[None, :, None]

    def conv_transpose1d(h, w, b):           # nn.ConvTranspose1d, k=3, s=1, pad=1
        Bq, _, Lq = h.shape
        cout = w.shape[1]
        yf = jnp.zeros((Bq, cout, Lq + 2), jnp.float32)
        for k in range(3):
            yf = yf.at[:, :, k:k + Lq].add(
                jnp.einsum("bcl,co->bol", h, w[:, :, k], precision=hi))
        return yf[:, :, 1:1 + Lq] + b[None, :, None]

    def bn_relu(y, g, be):                   # training-mode BN (batch stats)
        m = jnp.mean(y, axis=(0, 2), keepdims=True)
        v = jnp.mean((y - m) ** 2, axis=(0, 2), keepdims=True)
        return jnp.maximum((y - m) * jax.lax.rsqrt(v + _EPS) * g[None, :, None]
                           + be[None, :, None], 0.0)

    h = bn_relu(conv1d(h, raw["w1"], raw["b1"]), raw["g1"], raw["be1"])
    h = bn_relu(conv1d(h, raw["w2"], raw["b2"]), raw["g2"], raw["be2"])
    h = bn_relu(conv_transpose1d(h, raw["w3"], raw["b3"]), raw["g3"], raw["be3"])
    return conv_transpose1d(h, raw["w4"], raw["b4"])


if __name__ == "__main__":
    key = jax.random.PRNGKey(0)
    kx, kt, kparam = jax.random.split(key, 3)
    B, in_ch, out_ch, L = 2, 4, 4, 16
    n_feat, time_emb_dim = 64, 256

    raw = init_params(kparam, in_ch, out_ch, n_feat=n_feat, time_emb_dim=time_emb_dim)
    packed = pack_params(raw, in_ch, out_ch, n_feat, time_emb_dim)

    x = jax.random.normal(kx, (B, in_ch, L), jnp.float32)      # NCL layout
    t = jax.random.randint(kt, (B,), 0, 100).astype(jnp.float32)

    fwd = jax.jit(functools.partial(unet_forward, out_channels=out_ch))
    out = jax.block_until_ready(fwd(packed, x, t))
    assert out.shape == (B, out_ch, L), out.shape

    ref = jax.block_until_ready(jax.jit(ref_forward)(raw, x, t))
    # Kernel matmuls run single-pass bf16 on the MXU (per the perf feedback);
    # the reference runs at HIGHEST precision, so allow a wider tolerance.
    np.testing.assert_allclose(np.asarray(out), np.asarray(ref), rtol=5e-2, atol=5e-2)
    print("KERNEL_OK")
</pallas_src>

<mosaic_0001>
module attributes {stable_mosaic.version = 11 : i64} {
  func.func @_unet_fused_kernel(%arg0: memref<8x1xf32, #tpu.memory_space<vmem>>, %arg1: memref<1x128xf32, #tpu.memory_space<vmem>>, %arg2: memref<256x256xbf16, #tpu.memory_space<vmem>>, %arg3: memref<1x256xf32, #tpu.memory_space<vmem>>, %arg4: memref<48x24xf32, #tpu.memory_space<vmem>>, %arg5: memref<24x128xbf16, #tpu.memory_space<vmem>>, %arg6: memref<256x384xbf16, #tpu.memory_space<vmem>>, %arg7: memref<384x8xbf16, #tpu.memory_space<vmem>>, %arg8: memref<8x128xf32, #tpu.memory_space<vmem>>, %arg9: memref<48x16xf32, #tpu.memory_space<vmem>>, %arg10: memref<2x384x128xbf16, #tpu.memory_space<any>>, %arg11: memref<48x8xf32, #tpu.memory_space<vmem>>, %arg12: memref<2x384x128xbf16, #tpu.memory_space<vmem>>, %arg13: memref<!tpu.dma_semaphore, #tpu.memory_space<semaphore_mem>>) attributes {dimension_semantics = [], scalar_prefetch = 0 : i64, scratch_operands = 2 : i64, tpu.core_type = #tpu.core_type<tc>} {
    tpu.enqueue_dma source(%arg10 : memref<2x384x128xbf16, #tpu.memory_space<any>>) target(%arg12 : memref<2x384x128xbf16, #tpu.memory_space<vmem>>) target_semaphore(%arg13 : memref<!tpu.dma_semaphore, #tpu.memory_space<semaphore_mem>>)
    %c0 = arith.constant 0 : index
    %c0_0 = arith.constant 0 : index
    %0 = vector.load %arg9[%c0, %c0_0] : memref<48x16xf32, #tpu.memory_space<vmem>>, vector<48x16xf32>
    %1 = vector.extract_strided_slice %0 {offsets = [0, 0], sizes = [48, 8], strides = [1, 1]} : vector<48x16xf32> to vector<48x8xf32>
    %2 = vector.extract_strided_slice %0 {offsets = [0, 8], sizes = [48, 1], strides = [1, 1]} : vector<48x16xf32> to vector<48x1xf32>
    %3 = vector.extract_strided_slice %0 {offsets = [0, 9], sizes = [48, 1], strides = [1, 1]} : vector<48x16xf32> to vector<48x1xf32>
    %4 = vector.extract_strided_slice %0 {offsets = [0, 10], sizes = [48, 1], strides = [1, 1]} : vector<48x16xf32> to vector<48x1xf32>
    %c0_1 = arith.constant 0 : index
    %c0_2 = arith.constant 0 : index
    %5 = vector.load %arg8[%c0_1, %c0_2] : memref<8x128xf32, #tpu.memory_space<vmem>>, vector<8x128xf32>
    %c0_3 = arith.constant 0 : index
    %c0_4 = arith.constant 0 : index
    %6 = vector.load %arg0[%c0_3, %c0_4] : memref<8x1xf32, #tpu.memory_space<vmem>>, vector<8x1xf32>
    %c0_5 = arith.constant 0 : index
    %c0_6 = arith.constant 0 : index
    %7 = vector.load %arg1[%c0_5, %c0_6] : memref<1x128xf32, #tpu.memory_space<vmem>>, vector<1x128xf32>
    %8 = vector.broadcast %6 : vector<8x1xf32> to vector<8x128xf32>
    %9 = vector.broadcast %7 : vector<1x128xf32> to vector<8x128xf32>
    %10 = arith.mulf %8, %9 : vector<8x128xf32>
    %11 = math.sin %10 : vector<8x128xf32>
    %12 = math.cos %10 : vector<8x128xf32>
    %13 = tpu.concatenate %11, %12 in 1 : vector<8x128xf32>, vector<8x128xf32> -> vector<8x256xf32>
    %14 = arith.truncf %13 : vector<8x256xf32> to vector<8x256xbf16>
    %c0_7 = arith.constant 0 : index
    %c0_8 = arith.constant 0 : index
    %15 = vector.load %arg2[%c0_7, %c0_8] : memref<256x256xbf16, #tpu.memory_space<vmem>>, vector<256x256xbf16>
    %cst = arith.constant dense<0.000000e+00> : vector<8x256xf32>
    %16 = tpu.matmul %14, %15, %cst {dimension_numbers = #tpu.dot_dimension_numbers<[1], [0], [0], [1], [0, 0, 1, 1], [], []>} : vector<8x256xbf16>, vector<256x256xbf16>, vector<8x256xf32> -> vector<8x256xf32>
    %c0_9 = arith.constant 0 : index
    %c0_10 = arith.constant 0 : index
    %17 = vector.load %arg3[%c0_9, %c0_10] : memref<1x256xf32, #tpu.memory_space<vmem>>, vector<1x256xf32>
    %18 = vector.broadcast %17 : vector<1x256xf32> to vector<8x256xf32>
    %19 = arith.addf %16, %18 : vector<8x256xf32>
    %cst_11 = arith.constant 0.000000e+00 : f32
    %20 = vector.broadcast %cst_11 : f32 to vector<8x256xf32>
    %21 = arith.maximumf %19, %20 : vector<8x256xf32>
    %c0_12 = arith.constant 0 : index
    %c0_13 = arith.constant 0 : index
    %22 = vector.load %arg4[%c0_12, %c0_13] : memref<48x24xf32, #tpu.memory_space<vmem>>, vector<48x24xf32>
    %23 = arith.truncf %22 : vector<48x24xf32> to vector<48x24xbf16>
    %c0_14 = arith.constant 0 : index
    %c0_15 = arith.constant 0 : index
    %24 = vector.load %arg5[%c0_14, %c0_15] : memref<24x128xbf16, #tpu.memory_space<vmem>>, vector<24x128xbf16>
    %cst_16 = arith.constant dense<0.000000e+00> : vector<48x128xf32>
    %25 = tpu.matmul %23, %24, %cst_16 {dimension_numbers = #tpu.dot_dimension_numbers<[1], [0], [0], [1], [0, 0, 1, 1], [], []>} : vector<48x24xbf16>, vector<24x128xbf16>, vector<48x128xf32> -> vector<48x128xf32>
    %26 = arith.truncf %21 : vector<8x256xf32> to vector<8x256xbf16>
    %c0_17 = arith.constant 0 : index
    %c0_18 = arith.constant 0 : index
    %27 = vector.load %arg6[%c0_17, %c0_18] : memref<256x384xbf16, #tpu.memory_space<vmem>>, vector<256x384xbf16>
    %cst_19 = arith.constant dense<0.000000e+00> : vector<8x384xf32>
    %28 = tpu.matmul %26, %27, %cst_19 {dimension_numbers = #tpu.dot_dimension_numbers<[1], [0], [0], [1], [0, 0, 1, 1], [], []>} : vector<8x256xbf16>, vector<256x384xbf16>, vector<8x384xf32> -> vector<8x384xf32>
    %cst_20 = arith.constant dense<0.000000e+00> : vector<48x384xf32>
    %29 = tpu.matmul %1, %28, %cst_20 {dimension_numbers = #tpu.dot_dimension_numbers<[1], [0], [0], [1], [0, 0, 1, 1], [], []>} : vector<48x8xf32>, vector<8x384xf32>, vector<48x384xf32> -> vector<48x384xf32>
    %30 = vector.extract_strided_slice %29 {offsets = [0, 0], sizes = [48, 128], strides = [1, 1]} : vector<48x384xf32> to vector<48x128xf32>
    %31 = arith.addf %25, %30 : vector<48x128xf32>
    %32 = vector.extract_strided_slice %29 {offsets = [0, 128], sizes = [48, 128], strides = [1, 1]} : vector<48x384xf32> to vector<48x128xf32>
    %33 = vector.broadcast %3 : vector<48x1xf32> to vector<48x128xf32>
    %34 = arith.mulf %33, %32 : vector<48x128xf32>
    %35 = arith.subf %31, %34 : vector<48x128xf32>
    %36 = vector.extract_strided_slice %29 {offsets = [0, 256], sizes = [48, 128], strides = [1, 1]} : vector<48x384xf32> to vector<48x128xf32>
    %37 = vector.broadcast %4 : vector<48x1xf32> to vector<48x128xf32>
    %38 = arith.mulf %37, %36 : vector<48x128xf32>
    %39 = arith.subf %35, %38 : vector<48x128xf32>
    %40 = vector.extract_strided_slice %5 {offsets = [0, 0], sizes = [1, 128], strides = [1, 1]} : vector<8x128xf32> to vector<1x128xf32>
    %41 = vector.extract_strided_slice %5 {offsets = [1, 0], sizes = [1, 128], strides = [1, 1]} : vector<8x128xf32> to vector<1x128xf32>
    %42 = vector.broadcast %2 : vector<48x1xf32> to vector<48x128xf32>
    %43 = arith.mulf %39, %42 : vector<48x128xf32>
    %cst_21 = arith.constant dense<0.000000e+00> : vector<128xf32>
    %44 = vector.multi_reduction <add>, %43, %cst_21 [0] : vector<48x128xf32> to vector<128xf32>
    %45 = vector.shape_cast %44 : vector<128xf32> to vector<1x128xf32>
    %cst_22 = arith.constant 3.125000e-02 : f32
    %46 = vector.broadcast %cst_22 : f32 to vector<1x128xf32>
    %47 = arith.mulf %45, %46 : vector<1x128xf32>
    %48 = arith.mulf %43, %43 : vector<48x128xf32>
    %cst_23 = arith.constant dense<0.000000e+00> : vector<128xf32>
    %49 = vector.multi_reduction <add>, %48, %cst_23 [0] : vector<48x128xf32> to vector<128xf32>
    %50 = vector.shape_cast %49 : vector<128xf32> to vector<1x128xf32>
    %cst_24 = arith.constant 3.125000e-02 : f32
    %51 = vector.broadcast %cst_24 : f32 to vector<1x128xf32>
    %52 = arith.mulf %50, %51 : vector<1x128xf32>
    %53 = arith.mulf %47, %47 : vector<1x128xf32>
    %54 = arith.subf %52, %53 : vector<1x128xf32>
    %cst_25 = arith.constant 0.000000e+00 : f32
    %55 = vector.broadcast %cst_25 : f32 to vector<1x128xf32>
    %56 = arith.maximumf %54, %55 : vector<1x128xf32>
    %57 = vector.broadcast %47 : vector<1x128xf32> to vector<48x128xf32>
    %58 = arith.subf %43, %57 : vector<48x128xf32>
    %cst_26 = arith.constant 9.99999974E-6 : f32
    %59 = vector.broadcast %cst_26 : f32 to vector<1x128xf32>
    %60 = arith.addf %56, %59 : vector<1x128xf32>
    %61 = math.rsqrt %60 : vector<1x128xf32>
    %62 = vector.broadcast %61 : vector<1x128xf32> to vector<48x128xf32>
    %63 = arith.mulf %58, %62 : vector<48x128xf32>
    %64 = vector.broadcast %40 : vector<1x128xf32> to vector<48x128xf32>
    %65 = arith.mulf %63, %64 : vector<48x128xf32>
    %66 = vector.broadcast %41 : vector<1x128xf32> to vector<48x128xf32>
    %67 = arith.addf %65, %66 : vector<48x128xf32>
    %cst_27 = arith.constant 0.000000e+00 : f32
    %68 = vector.broadcast %cst_27 : f32 to vector<48x128xf32>
    %69 = arith.maximumf %67, %68 : vector<48x128xf32>
    %70 = vector.broadcast %2 : vector<48x1xf32> to vector<48x128xf32>
    %71 = arith.mulf %69, %70 : vector<48x128xf32>
    tpu.wait_dma2 semaphore(%arg13 : memref<!tpu.dma_semaphore, #tpu.memory_space<semaphore_mem>>) src(%arg10 : memref<2x384x128xbf16, #tpu.memory_space<any>>) dst(%arg12 : memref<2x384x128xbf16, #tpu.memory_space<vmem>>)
    %c1_i32 = arith.constant 1 : i32
    %72 = tpu.dynamic_rotate %71 by %c1_i32 dim 0 : vector<48x128xf32>, i32 -> vector<48x128xf32>
    %c47_i32 = arith.constant 47 : i32
    %73 = tpu.dynamic_rotate %71 by %c47_i32 dim 0 : vector<48x128xf32>, i32 -> vector<48x128xf32>
    %74 = tpu.concatenate %72, %71, %73 in 1 : vector<48x128xf32>, vector<48x128xf32>, vector<48x128xf32> -> vector<48x384xf32>
    %75 = arith.truncf %74 : vector<48x384xf32> to vector<48x384xbf16>
    %c0_28 = arith.constant 0 : index
    %c0_29 = arith.constant 0 : index
    %c0_30 = arith.constant 0 : index
    %76 = vector.load %arg12[%c0_28, %c0_29, %c0_30] : memref<2x384x128xbf16, #tpu.memory_space<vmem>>, vector<1x384x128xbf16>
    %77 = vector.shape_cast %76 : vector<1x384x128xbf16> to vector<384x128xbf16>
    %cst_31 = arith.constant dense<0.000000e+00> : vector<48x128xf32>
    %78 = tpu.matmul %75, %77, %cst_31 {dimension_numbers = #tpu.dot_dimension_numbers<[1], [0], [0], [1], [0, 0, 1, 1], [], []>} : vector<48x384xbf16>, vector<384x128xbf16>, vector<48x128xf32> -> vector<48x128xf32>
    %79 = vector.extract_strided_slice %5 {offsets = [2, 0], sizes = [1, 128], strides = [1, 1]} : vector<8x128xf32> to vector<1x128xf32>
    %80 = vector.extract_strided_slice %5 {offsets = [3, 0], sizes = [1, 128], strides = [1, 1]} : vector<8x128xf32> to vector<1x128xf32>
    %81 = vector.broadcast %2 : vector<48x1xf32> to vector<48x128xf32>
    %82 = arith.mulf %78, %81 : vector<48x128xf32>
    %cst_32 = arith.constant dense<0.000000e+00> : vector<128xf32>
    %83 = vector.multi_reduction <add>, %82, %cst_32 [0] : vector<48x128xf32> to vector<128xf32>
    %84 = vector.shape_cast %83 : vector<128xf32> to vector<1x128xf32>
    %cst_33 = arith.constant 3.125000e-02 : f32
    %85 = vector.broadcast %cst_33 : f32 to vector<1x128xf32>
    %86 = arith.mulf %84, %85 : vector<1x128xf32>
    %87 = arith.mulf %82, %82 : vector<48x128xf32>
    %cst_34 = arith.constant dense<0.000000e+00> : vector<128xf32>
    %88 = vector.multi_reduction <add>, %87, %cst_34 [0] : vector<48x128xf32> to vector<128xf32>
    %89 = vector.shape_cast %88 : vector<128xf32> to vector<1x128xf32>
    %cst_35 = arith.constant 3.125000e-02 : f32
    %90 = vector.broadcast %cst_35 : f32 to vector<1x128xf32>
    %91 = arith.mulf %89, %90 : vector<1x128xf32>
    %92 = arith.mulf %86, %86 : vector<1x128xf32>
    %93 = arith.subf %91, %92 : vector<1x128xf32>
    %cst_36 = arith.constant 0.000000e+00 : f32
    %94 = vector.broadcast %cst_36 : f32 to vector<1x128xf32>
    %95 = arith.maximumf %93, %94 : vector<1x128xf32>
    %96 = vector.broadcast %86 : vector<1x128xf32> to vector<48x128xf32>
    %97 = arith.subf %82, %96 : vector<48x128xf32>
    %cst_37 = arith.constant 9.99999974E-6 : f32
    %98 = vector.broadcast %cst_37 : f32 to vector<1x128xf32>
    %99 = arith.addf %95, %98 : vector<1x128xf32>
    %100 = math.rsqrt %99 : vector<1x128xf32>
    %101 = vector.broadcast %100 : vector<1x128xf32> to vector<48x128xf32>
    %102 = arith.mulf %97, %101 : vector<48x128xf32>
    %103 = vector.broadcast %79 : vector<1x128xf32> to vector<48x128xf32>
    %104 = arith.mulf %102, %103 : vector<48x128xf32>
    %105 = vector.broadcast %80 : vector<1x128xf32> to vector<48x128xf32>
    %106 = arith.addf %104, %105 : vector<48x128xf32>
    %cst_38 = arith.constant 0.000000e+00 : f32
    %107 = vector.broadcast %cst_38 : f32 to vector<48x128xf32>
    %108 = arith.maximumf %106, %107 : vector<48x128xf32>
    %109 = vector.broadcast %2 : vector<48x1xf32> to vector<48x128xf32>
    %110 = arith.mulf %108, %109 : vector<48x128xf32>
    %c1_i32_39 = arith.constant 1 : i32
    %111 = tpu.dynamic_rotate %110 by %c1_i32_39 dim 0 : vector<48x128xf32>, i32 -> vector<48x128xf32>
    %c47_i32_40 = arith.constant 47 : i32
    %112 = tpu.dynamic_rotate %110 by %c47_i32_40 dim 0 : vector<48x128xf32>, i32 -> vector<48x128xf32>
    %113 = tpu.concatenate %111, %110, %112 in 1 : vector<48x128xf32>, vector<48x128xf32>, vector<48x128xf32> -> vector<48x384xf32>
    %114 = arith.truncf %113 : vector<48x384xf32> to vector<48x384xbf16>
    %c1 = arith.constant 1 : index
    %c0_41 = arith.constant 0 : index
    %c0_42 = arith.constant 0 : index
    %115 = vector.load %arg12[%c1, %c0_41, %c0_42] : memref<2x384x128xbf16, #tpu.memory_space<vmem>>, vector<1x384x128xbf16>
    %116 = vector.shape_cast %115 : vector<1x384x128xbf16> to vector<384x128xbf16>
    %cst_43 = arith.constant dense<0.000000e+00> : vector<48x128xf32>
    %117 = tpu.matmul %114, %116, %cst_43 {dimension_numbers = #tpu.dot_dimension_numbers<[1], [0], [0], [1], [0, 0, 1, 1], [], []>} : vector<48x384xbf16>, vector<384x128xbf16>, vector<48x128xf32> -> vector<48x128xf32>
    %118 = vector.extract_strided_slice %5 {offsets = [4, 0], sizes = [1, 128], strides = [1, 1]} : vector<8x128xf32> to vector<1x128xf32>
    %119 = vector.extract_strided_slice %5 {offsets = [5, 0], sizes = [1, 128], strides = [1, 1]} : vector<8x128xf32> to vector<1x128xf32>
    %120 = vector.broadcast %2 : vector<48x1xf32> to vector<48x128xf32>
    %121 = arith.mulf %117, %120 : vector<48x128xf32>
    %cst_44 = arith.constant dense<0.000000e+00> : vector<128xf32>
    %122 = vector.multi_reduction <add>, %121, %cst_44 [0] : vector<48x128xf32> to vector<128xf32>
    %123 = vector.shape_cast %122 : vector<128xf32> to vector<1x128xf32>
    %cst_45 = arith.constant 3.125000e-02 : f32
    %124 = vector.broadcast %cst_45 : f32 to vector<1x128xf32>
    %125 = arith.mulf %123, %124 : vector<1x128xf32>
    %126 = arith.mulf %121, %121 : vector<48x128xf32>
    %cst_46 = arith.constant dense<0.000000e+00> : vector<128xf32>
    %127 = vector.multi_reduction <add>, %126, %cst_46 [0] : vector<48x128xf32> to vector<128xf32>
    %128 = vector.shape_cast %127 : vector<128xf32> to vector<1x128xf32>
    %cst_47 = arith.constant 3.125000e-02 : f32
    %129 = vector.broadcast %cst_47 : f32 to vector<1x128xf32>
    %130 = arith.mulf %128, %129 : vector<1x128xf32>
    %131 = arith.mulf %125, %125 : vector<1x128xf32>
    %132 = arith.subf %130, %131 : vector<1x128xf32>
    %cst_48 = arith.constant 0.000000e+00 : f32
    %133 = vector.broadcast %cst_48 : f32 to vector<1x128xf32>
    %134 = arith.maximumf %132, %133 : vector<1x128xf32>
    %135 = vector.broadcast %125 : vector<1x128xf32> to vector<48x128xf32>
    %136 = arith.subf %121, %135 : vector<48x128xf32>
    %cst_49 = arith.constant 9.99999974E-6 : f32
    %137 = vector.broadcast %cst_49 : f32 to vector<1x128xf32>
    %138 = arith.addf %134, %137 : vector<1x128xf32>
    %139 = math.rsqrt %138 : vector<1x128xf32>
    %140 = vector.broadcast %139 : vector<1x128xf32> to vector<48x128xf32>
    %141 = arith.mulf %136, %140 : vector<48x128xf32>
    %142 = vector.broadcast %118 : vector<1x128xf32> to vector<48x128xf32>
    %143 = arith.mulf %141, %142 : vector<48x128xf32>
    %144 = vector.broadcast %119 : vector<1x128xf32> to vector<48x128xf32>
    %145 = arith.addf %143, %144 : vector<48x128xf32>
    %cst_50 = arith.constant 0.000000e+00 : f32
    %146 = vector.broadcast %cst_50 : f32 to vector<48x128xf32>
    %147 = arith.maximumf %145, %146 : vector<48x128xf32>
    %148 = vector.broadcast %2 : vector<48x1xf32> to vector<48x128xf32>
    %149 = arith.mulf %147, %148 : vector<48x128xf32>
    %c1_i32_51 = arith.constant 1 : i32
    %150 = tpu.dynamic_rotate %149 by %c1_i32_51 dim 0 : vector<48x128xf32>, i32 -> vector<48x128xf32>
    %c47_i32_52 = arith.constant 47 : i32
    %151 = tpu.dynamic_rotate %149 by %c47_i32_52 dim 0 : vector<48x128xf32>, i32 -> vector<48x128xf32>
    %152 = tpu.concatenate %150, %149, %151 in 1 : vector<48x128xf32>, vector<48x128xf32>, vector<48x128xf32> -> vector<48x384xf32>
    %153 = arith.truncf %152 : vector<48x384xf32> to vector<48x384xbf16>
    %c0_53 = arith.constant 0 : index
    %c0_54 = arith.constant 0 : index
    %154 = vector.load %arg7[%c0_53, %c0_54] : memref<384x8xbf16, #tpu.memory_space<vmem>>, vector<384x8xbf16>
    %cst_55 = arith.constant dense<0.000000e+00> : vector<48x8xf32>
    %155 = tpu.matmul %153, %154, %cst_55 {dimension_numbers = #tpu.dot_dimension_numbers<[1], [0], [0], [1], [0, 0, 1, 1], [], []>} : vector<48x384xbf16>, vector<384x8xbf16>, vector<48x8xf32> -> vector<48x8xf32>
    %156 = vector.extract_strided_slice %5 {offsets = [6, 0], sizes = [1, 8], strides = [1, 1]} : vector<8x128xf32> to vector<1x8xf32>
    %157 = vector.broadcast %156 : vector<1x8xf32> to vector<48x8xf32>
    %158 = arith.addf %155, %157 : vector<48x8xf32>
    %c0_56 = arith.constant 0 : index
    %c0_57 = arith.constant 0 : index
    %159 = vector.load %arg11[%c0_56, %c0_57] : memref<48x8xf32, #tpu.memory_space<vmem>>, vector<48x8xf32>
    tpu.vector_store %arg11[%c0_56, %c0_57], %158 {strides = array<i32>} : memref<48x8xf32, #tpu.memory_space<vmem>>, vector<48x8xf32>,
    return
  }
}

</mosaic_0001>

<llo_original>
// kernel: unet_forward.1
$region0: #{unet_forward.1}
  #allocation0 [shape = 'u32[]', space=smem, size = 0x4, offset = 0x4, fixed_abs, tag = 'smem constant byte address 0x4 - core index']
  #allocation1 [shape = 'u32[72,128]{1,0:T(1,128)}', space=vmem, size = 0x9000, scoped, tag = 'internal scratch']
  #allocation2 [shape = 'bf16[2,384,128]{2,1,0:T(8,128)(2,1)}', space=vmem, size = 0x30000, scoped, tag = 'scratch operand']
  #allocation3 [shape = 's32[1]{0}', space=sflag, size = 0x4, scoped, tag = 'scratch operand']
  #allocation6 [shape = 's32[]', space=sflag, size = 0x4, offset = 0, fixed_abs, tag = 'sflag constant byte address 0x0 - dummy sync flag']
  #allocation7 [shape = 's32[]', space=sflag, size = 0x4, offset = 0, fixed_abs, tag = 'sflag constant byte address 0x0 - dummy sync flag']
  #allocation8 [shape = 'u32[]', space=smem, size = 0x4, offset = 0x44, fixed_abs, tag = 'smem constant byte address 0x44 - assertion arg 0']
  #allocation9 [shape = 'u32[]', space=smem, size = 0x4, offset = 0x48, fixed_abs, tag = 'smem constant byte address 0x48 - assertion arg 1']
  %s0 = inlined_call_operand.vmem [shape: f32[8,1], index: 0, kind: input, shape index: {}]
  %s1 = inlined_call_operand.vmem [shape: f32[1,128], index: 1, kind: input, shape index: {}]
  %s2 = inlined_call_operand.vmem [shape: bf16[256,256], index: 2, kind: input, shape index: {}]
  %s3 = inlined_call_operand.vmem [shape: f32[1,256], index: 3, kind: input, shape index: {}]
  %s4 = inlined_call_operand.vmem [shape: f32[48,24], index: 4, kind: input, shape index: {}]
  %s5 = inlined_call_operand.vmem [shape: bf16[24,128], index: 5, kind: input, shape index: {}]
  %s6 = inlined_call_operand.hbm [shape: bf16[256,384], index: 6, kind: input, shape index: {}]
  %s7 = inlined_call_operand.vmem [shape: bf16[384,8], index: 7, kind: input, shape index: {}]
  %s8 = inlined_call_operand.vmem [shape: f32[8,128], index: 8, kind: input, shape index: {}]
  %s9 = inlined_call_operand.vmem [shape: f32[48,16], index: 9, kind: input, shape index: {}]
  %s10 = inlined_call_operand.hbm [shape: bf16[2,384,128], index: 10, kind: input, shape index: {}]
  %s11 = inlined_call_operand.vmem [shape: f32[48,8], index: 11, kind: output, shape index: {}]
  %s12 = sld [smem:[#allocation0]]
  $region58: #{unet_forward.1} parent=0
    _
  %s14 = ssub.s32 1, %s12
  %s15 = scalar_select 0, %s14, %s12
  $region1: #{unet_forward.1} parent=0
    #allocation4 [shape = 'u8[196608]{0}', space=vmem, size = 0x30000, scoped, tag = 'input window, operand 6, single buffered']
    #allocation5 [shape = 's32[1]{0}', space=sflag, size = 0x4, scoped, tag = 'scoped memory for unet_forward.1']
    %16 = vsyncpa [#allocation5], 0
    // Predicated region
    $region2: #{unet_forward.1} parent=1 // pred_check
      _
    $region3: #{unet_forward.1} parent=1 // pred_check_branch
      %18 = sbr.rel (0) target = $region5
    $region4: #{unet_forward.1} parent=1 // pred_region
      _
    $region5: #{unet_forward.1} parent=1 // pred_fallthru
      _
    // Predicated region
    $region6: #{unet_forward.1} parent=1 // pred_check
      _
    $region7: #{unet_forward.1} parent=1 // pred_check_branch
      %20 = sbr.rel (0) target = $region9
    $region8: #{unet_forward.1} parent=1 // pred_region
      _
    $region9: #{unet_forward.1} parent=1 // pred_fallthru
      _
    // Predicated region
    $region10: #{unet_forward.1} parent=1 // pred_check
      _
    $region11: #{unet_forward.1} parent=1 // pred_check_branch
      %22 = sbr.rel (0) target = $region13
    $region12: #{unet_forward.1} parent=1 // pred_region
      _
    $region13: #{unet_forward.1} parent=1 // pred_fallthru
      _
    // Predicated region
    $region14: #{unet_forward.1} parent=1 // pred_check
      _
    $region15: #{unet_forward.1} parent=1 // pred_check_branch
      %24 = sbr.rel (0) target = $region17
    $region16: #{unet_forward.1} parent=1 // pred_region
      _
    $region17: #{unet_forward.1} parent=1 // pred_fallthru
      _
    // Predicated region
    $region18: #{unet_forward.1} parent=1 // pred_check
      _
    $region19: #{unet_forward.1} parent=1 // pred_check_branch
      %26 = sbr.rel (0) target = $region21
    $region20: #{unet_forward.1} parent=1 // pred_region
      _
    $region21: #{unet_forward.1} parent=1 // pred_fallthru
      _
    // Predicated region
    $region22: #{unet_forward.1} parent=1 // pred_check
      _
    $region23: #{unet_forward.1} parent=1 // pred_check_branch
      %28 = sbr.rel (0) target = $region25
    $region24: #{unet_forward.1} parent=1 // pred_region
      _
    $region25: #{unet_forward.1} parent=1 // pred_fallthru
      _
    // Predicated region
    $region26: #{unet_forward.1} parent=1 // pred_check
      _
    $region27: #{unet_forward.1} parent=1 // pred_check_branch
      %30 = sbr.rel (0) target = $region29
    $region28: #{unet_forward.1} parent=1 // pred_region
      %32 = vsyncadd [#allocation5], 0
      %s33 = sshll.u32 %s6, 4
      %s34 = int_to_ptr.hbm [resolvable:$true] %s33
      %s35 = sshll.u32 [#allocation4], 4
      %s36 = int_to_ptr.vmem [resolvable:$true] %s35
      %41 = dma.hbm_to_vmem [thread:$0]  %s34, 6144, %s36, [#allocation5], 192, 192, 12
    $region29: #{unet_forward.1} parent=1 // pred_fallthru
      _
    // Predicated region
    $region30: #{unet_forward.1} parent=1 // pred_check
      _
    $region31: #{unet_forward.1} parent=1 // pred_check_branch
      %43 = sbr.rel (0) target = $region33
    $region32: #{unet_forward.1} parent=1 // pred_region
      _
    $region33: #{unet_forward.1} parent=1 // pred_fallthru
      _
    // Predicated region
    $region34: #{unet_forward.1} parent=1 // pred_check
      _
    $region35: #{unet_forward.1} parent=1 // pred_check_branch
      %45 = sbr.rel (0) target = $region37
    $region36: #{unet_forward.1} parent=1 // pred_region
      _
    $region37: #{unet_forward.1} parent=1 // pred_fallthru
      _
    // Predicated region
    $region38: #{unet_forward.1} parent=1 // pred_check
      _
    $region39: #{unet_forward.1} parent=1 // pred_check_branch
      %47 = sbr.rel (0) target = $region41
    $region40: #{unet_forward.1} parent=1 // pred_region
      _
    $region41: #{unet_forward.1} parent=1 // pred_fallthru
      _
    // Predicated region
    $region42: #{unet_forward.1} parent=1 // pred_check
      _
    $region43: #{unet_forward.1} parent=1 // pred_check_branch
      %49 = sbr.rel (0) target = $region45
    $region44: #{unet_forward.1} parent=1 // pred_region
      %51 = dma.done [#allocation5], 6144
    $region45: #{unet_forward.1} parent=1 // pred_fallthru
      _
    // Predicated region
    $region46: #{unet_forward.1} parent=1 // pred_check
      _
    $region47: #{unet_forward.1} parent=1 // pred_check_branch
      %54 = sbr.rel target = $region49
    $region48: #{unet_forward.1} parent=1 // pred_region
      %55 = sst [smem:[#allocation8]] [#allocation7]
      %56 = sst [smem:[#allocation9]] [#allocation6]
    $region49: #{unet_forward.1} parent=1 // pred_fallthru
      _
    %58 = shalt.err (0)
    %s60 = sshll.u32 %s10, 4
    %s61 = int_to_ptr.hbm [resolvable:$true] %s60
    %s62 = sshll.u32 [#allocation2], 4
    %s63 = int_to_ptr.vmem [resolvable:$true] %s62
    %65 = dma.hbm_to_vmem [thread:$0]  %s61, 6144, %s63, [#allocation3]
    %v66 = vld [vmem:[%s9] sm:$0xff]
    %v67 = vld [vmem:[%s9 + $0x8] sm:$0xff]
    %v68 = vld [vmem:[%s9 + $0x10] sm:$0xff]
    %v69 = vld [vmem:[%s9 + $0x18] sm:$0xff]
    %v70 = vld [vmem:[%s9 + $0x20] sm:$0xff]
    %v71 = vld [vmem:[%s9 + $0x28] sm:$0xff]
    %v72 = vld [vmem:[%s8] sm:$0xff]
    %v73 = vld [vmem:[%s0] sm:$0xff]
    %v74 = vld [vmem:[%s1] sm:$0x1]
    %76 = vset.pattern.permute.xlu0 0
    %77 = vperm.xlu0 %76, %v73
    %v78 = vpop.permute.xlu0 %77
    %v81 = vperm.slane %v74, 0
    %v83 = vmul.f32 %v78, %v81
    %v84 = vand.u32 2147483647, %v83
    %vm85 = vcmp.le.f32.partialorder %v84, 0.7853982
    %vm86 = vcmp.lt.s32.totalorder %v83, 0
    %v87 = vand.u32 %v83, 2139095040
    %v88 = vshrl.u32 %v87, 23
    %v89 = vsub.s32 %v88, 127
    %v90 = vand.u32 2147483647, %v83
    %v91 = vand.u32 %v90, 8388607
    %v92 = vor.u32 %v91, 8388608
    %v93 = vsub.s32 0, %v92
    %v94 = vadd.s32 %v89, 1
    %vm95 = vcmp.gt.s32.totalorder %v94, 0
    %v96 = vsel %vm95, %v94, 0
    %v97 = vshrl.u32 %v96, 5
    %v98 = vand.u32 %v96, 31
    %v99 = vsub.s32 32, %v98
    %v100 = vshrl.u32 683565275, %v99
    %v101 = vshll.u32 683565275, %v98
    %v102 = vshrl.u32 2475754826, %v99
    %v103 = vor.u32 %v101, %v102
    %v104 = vshll.u32 2475754826, %v98
    %v105 = vshrl.u32 2131351028, %v99
    %v106 = vor.u32 %v104, %v105
    %v107 = vshll.u32 2131351028, %v98
    %v108 = vshrl.u32 2102212464, %v99
    %v109 = vor.u32 %v107, %v108
    %v110 = vshll.u32 2102212464, %v98
    %v111 = vshrl.u32 920167782, %v99
    %v112 = vor.u32 %v110, %v111
    %v113 = vshll.u32 920167782, %v98
    %v114 = vshrl.u32 1326507024, %v99
    %v115 = vor.u32 %v113, %v114
    %vm116 = vcmp.lt.s32.totalorder %v97, 1
    %vm117 = vcmp.lt.s32.totalorder %v97, 2
    %vm118 = vcmp.lt.s32.totalorder %v97, 3
    %vm119 = vcmp.lt.s32.totalorder %v97, 4
    %v120 = vsel %vm116, %v100, %v103
    %v121 = vsel %vm119, %v109, 2102212464
    %v122 = vsel %vm118, %v106, %v121
    %v123 = vsel %vm117, %v120, %v122
    %v124 = vsel %vm116, %v103, %v106
    %v125 = vsel %vm119, %v112, 920167782
    %v126 = vsel %vm118, %v109, %v125
    %v127 = vsel %vm117, %v124, %v126
    %v128 = vsel %vm116, %v106, %v109
    %v129 = vsel %vm119, %v115, 1326507024
    %v130 = vsel %vm118, %v112, %v129
    %v131 = vsel %vm117, %v128, %v130
    %v132 = vshll.u32 %v92, 8
    %v133 = vand.u32 %v132, 65535
    %v134 = vshrl.u32 %v132, 16
    %v135 = vand.u32 %v131, 65535
    %v136 = vshrl.u32 %v131, 16
    %v137 = vmul.u32 %v133, %v135
    %v138 = vmul.u32 %v133, %v136
    %v139 = vmul.u32 %v134, %v135
    %v140 = vmul.u32 %v134, %v136
    %v141 = vshll.u32 %v138, 16
    %v142 = vshrl.u32 %v138, 16
    %v143 = vshll.u32 %v139, 16
    %v144 = vshrl.u32 %v139, 16
    %vm145 = vc.u32 %v137, %v141
    %v146 = vsel %vm145, 1, 0
    %v147 = vadd.s32 %v137, %v141
    %v148 = vadd.s32 %v140, %v146
    %vm149 = vc.u32 %v147, %v143
    %v150 = vsel %vm149, 1, 0
    %v151 = vadd.s32 %v147, %v143
    %v152 = vadd.s32 %v148, %v150
    %v153 = vadd.s32 %v152, %v142
    %v154 = vadd.s32 %v153, %v144
    %v155 = vand.u32 %v132, 65535
    %v156 = vshrl.u32 %v132, 16
    %v157 = vand.u32 %v127, 65535
    %v158 = vshrl.u32 %v127, 16
    %v159 = vmul.u32 %v155, %v157
    %v160 = vmul.u32 %v155, %v158
    %v161 = vmul.u32 %v156, %v157
    %v162 = vmul.u32 %v156, %v158
    %v163 = vshll.u32 %v160, 16
    %v164 = vshrl.u32 %v160, 16
    %v165 = vshll.u32 %v161, 16
    %v166 = vshrl.u32 %v161, 16
    %vm167 = vc.u32 %v159, %v163
    %v168 = vsel %vm167, 1, 0
    %v169 = vadd.s32 %v159, %v163
    %v170 = vadd.s32 %v162, %v168
    %vm171 = vc.u32 %v169, %v165
    %v172 = vsel %vm171, 1, 0
    %v173 = vadd.s32 %v169, %v165
    %v174 = vadd.s32 %v170, %v172
    %v175 = vadd.s32 %v174, %v164
    %v176 = vadd.s32 %v175, %v166
    %v177 = vmul.u32 %v132, %v123
    %v178 = vadd.s32 %v154, %v173
    %vm179 = vc.u32 %v154, %v173
    %v180 = vadd.s32 %v176, 1
    %v181 = vsel %vm179, %v180, %v176
    %v182 = vadd.s32 %v177, %v181
    %v183 = vadd.s32 %v182, 536870912
    %v184 = vshrl.u32 %v183, 30
    %v185 = vshll.u32 %v184, 30
    %v186 = vsub.s32 %v182, %v185
    %vm187 = vcmp.lt.s32.totalorder %v186, 0
    %v188 = vsub.s32 0, %v186
    %v189 = vsel %vm187, %v188, %v186
    %v190 = vclz %v189
    %v191 = vsub.s32 %v190, 2
    %vm192 = vcmp.gt.s32.totalorder 0, %v191
    %v193 = vsel %vm192, 0, %v191
    %v194 = vsub.s32 32, %v193
    %v195 = vshll.u32 %v186, %v193
    %v196 = vshrl.u32 %v178, %v194
    %v197 = vor.u32 %v195, %v196
    %v198 = vsub.s32 4294967266, %v193
    %v199 = vadd.s32 %v198, 127
    %v200 = vshll.u32 %v199, 23
    %v201 = vor.u32 4788187, %v200
    %v202 = vand.u32 2147483647, %v201
    %v204 = vcvt.s32.f32 %v197
    %v205 = vmul.f32 %v204, %v202
    %v206 = vxor.u32 %v205, 2147483648
    %v207 = vsel %vm86, %v206, %v205
    %v208 = vsub.s32 4, %v184
    %v209 = vsel %vm86, %v208, %v184
    %v210 = vsel %vm85, %v83, %v207
    %v211 = vsel %vm85, 0, %v209
    %v212 = vmul.f32 %v210, %v210
    %v213 = vmul.f32 %v212, -0.001358992
    %v214 = vadd.f32 %v213, 0.041655596
    %v215 = vmul.f32 %v212, %v214
    %v216 = vadd.f32 %v215, -0.4999988
    %v217 = vmul.f32 %v212, %v216
    %v218 = vadd.f32 1.0, %v217
    %v219 = vmul.f32 %v210, %v210
    %v220 = vmul.f32 %v219, -0.00019511016
    %v221 = vadd.f32 %v220, 0.008332121
    %v222 = vmul.f32 %v219, %v221
    %v223 = vadd.f32 %v222, -0.16666654
    %v224 = vmul.f32 %v219, %v223
    %v225 = vadd.f32 %v224, 1.0
    %v226 = vmul.f32 %v225, %v210
    %vm227 = vweird.f32 %v83
    %v228 = vadd.s32 %v211, 3
    %v229 = vand.u32 %v228, 3
    %vm230 = vcmp.lt.s32.totalorder %v229, 2
    %vm231 = vcmp.eq.s32.totalorder %v229, 0
    %v232 = vxor.u32 %v226, 2147483648
    %v233 = vsel %vm231, %v218, %v232
    %vm234 = vcmp.eq.s32.totalorder %v229, 2
    %v235 = vxor.u32 %v218, 2147483648
    %v236 = vsel %vm234, %v235, %v226
    %v237 = vsel %vm230, %v233, %v236
    %v238 = vsel %vm227, nan, %v237
    %v239 = vand.u32 2147483647, %v83
    %vm240 = vcmp.le.f32.partialorder %v239, 0.7853982
    %vm241 = vcmp.lt.s32.totalorder %v83, 0
    %v242 = vand.u32 %v83, 2139095040
    %v243 = vshrl.u32 %v242, 23
    %v244 = vsub.s32 %v243, 127
    %v245 = vand.u32 2147483647, %v83
    %v246 = vand.u32 %v245, 8388607
    %v247 = vor.u32 %v246, 8388608
    %v248 = vsub.s32 0, %v247
    %v249 = vadd.s32 %v244, 1
    %vm250 = vcmp.gt.s32.totalorder %v249, 0
    %v251 = vsel %vm250, %v249, 0
    %v252 = vshrl.u32 %v251, 5
    %v253 = vand.u32 %v251, 31
    %v254 = vsub.s32 32, %v253
    %v255 = vshrl.u32 683565275, %v254
    %v256 = vshll.u32 683565275, %v253
    %v257 = vshrl.u32 2475754826, %v254
    %v258 = vor.u32 %v256, %v257
    %v259 = vshll.u32 2475754826, %v253
    %v260 = vshrl.u32 2131351028, %v254
    %v261 = vor.u32 %v259, %v260
    %v262 = vshll.u32 2131351028, %v253
    %v263 = vshrl.u32 2102212464, %v254
    %v264 = vor.u32 %v262, %v263
    %v265 = vshll.u32 2102212464, %v253
    %v266 = vshrl.u32 920167782, %v254
    %v267 = vor.u32 %v265, %v266
    %v268 = vshll.u32 920167782, %v253
    %v269 = vshrl.u32 1326507024, %v254
    %v270 = vor.u32 %v268, %v269
    %vm271 = vcmp.lt.s32.totalorder %v252, 1
    %vm272 = vcmp.lt.s32.totalorder %v252, 2
    %vm273 = vcmp.lt.s32.totalorder %v252, 3
    %vm274 = vcmp.lt.s32.totalorder %v252, 4
    %v275 = vsel %vm271, %v255, %v258
    %v276 = vsel %vm274, %v264, 2102212464
    %v277 = vsel %vm273, %v261, %v276
    %v278 = vsel %vm272, %v275, %v277
    %v279 = vsel %vm271, %v258, %v261
    %v280 = vsel %vm274, %v267, 920167782
    %v281 = vsel %vm273, %v264, %v280
    %v282 = vsel %vm272, %v279, %v281
    %v283 = vsel %vm271, %v261, %v264
    %v284 = vsel %vm274, %v270, 1326507024
    %v285 = vsel %vm273, %v267, %v284
    %v286 = vsel %vm272, %v283, %v285
    %v287 = vshll.u32 %v247, 8
    %v288 = vand.u32 %v287, 65535
    %v289 = vshrl.u32 %v287, 16
    %v290 = vand.u32 %v286, 65535
    %v291 = vshrl.u32 %v286, 16
    %v292 = vmul.u32 %v288, %v290
    %v293 = vmul.u32 %v288, %v291
    %v294 = vmul.u32 %v289, %v290
    %v295 = vmul.u32 %v289, %v291
    %v296 = vshll.u32 %v293, 16
    %v297 = vshrl.u32 %v293, 16
    %v298 = vshll.u32 %v294, 16
    %v299 = vshrl.u32 %v294, 16
    %vm300 = vc.u32 %v292, %v296
    %v301 = vsel %vm300, 1, 0
    %v302 = vadd.s32 %v292, %v296
    %v303 = vadd.s32 %v295, %v301
    %vm304 = vc.u32 %v302, %v298
    %v305 = vsel %vm304, 1, 0
    %v306 = vadd.s32 %v302, %v298
    %v307 = vadd.s32 %v303, %v305
    %v308 = vadd.s32 %v307, %v297
    %v309 = vadd.s32 %v308, %v299
    %v310 = vand.u32 %v287, 65535
    %v311 = vshrl.u32 %v287, 16
    %v312 = vand.u32 %v282, 65535
    %v313 = vshrl.u32 %v282, 16
    %v314 = vmul.u32 %v310, %v312
    %v315 = vmul.u32 %v310, %v313
    %v316 = vmul.u32 %v311, %v312
    %v317 = vmul.u32 %v311, %v313
    %v318 = vshll.u32 %v315, 16
    %v319 = vshrl.u32 %v315, 16
    %v320 = vshll.u32 %v316, 16
    %v321 = vshrl.u32 %v316, 16
    %vm322 = vc.u32 %v314, %v318
    %v323 = vsel %vm322, 1, 0
    %v324 = vadd.s32 %v314, %v318
    %v325 = vadd.s32 %v317, %v323
    %vm326 = vc.u32 %v324, %v320
    %v327 = vsel %vm326, 1, 0
    %v328 = vadd.s32 %v324, %v320
    %v329 = vadd.s32 %v325, %v327
    %v330 = vadd.s32 %v329, %v319
    %v331 = vadd.s32 %v330, %v321
    %v332 = vmul.u32 %v287, %v278
    %v333 = vadd.s32 %v309, %v328
    %vm334 = vc.u32 %v309, %v328
    %v335 = vadd.s32 %v331, 1
    %v336 = vsel %vm334, %v335, %v331
    %v337 = vadd.s32 %v332, %v336
    %v338 = vadd.s32 %v337, 536870912
    %v339 = vshrl.u32 %v338, 30
    %v340 = vshll.u32 %v339, 30
    %v341 = vsub.s32 %v337, %v340
    %vm342 = vcmp.lt.s32.totalorder %v341, 0
    %v343 = vsub.s32 0, %v341
    %v344 = vsel %vm342, %v343, %v341
    %v345 = vclz %v344
    %v346 = vsub.s32 %v345, 2
    %vm347 = vcmp.gt.s32.totalorder 0, %v346
    %v348 = vsel %vm347, 0, %v346
    %v349 = vsub.s32 32, %v348
    %v350 = vshll.u32 %v341, %v348
    %v351 = vshrl.u32 %v333, %v349
    %v352 = vor.u32 %v350, %v351
    %v353 = vsub.s32 4294967266, %v348
    %v354 = vadd.s32 %v353, 127
    %v355 = vshll.u32 %v354, 23
    %v356 = vor.u32 4788187, %v355
    %v357 = vand.u32 2147483647, %v356
    %v359 = vcvt.s32.f32 %v352
    %v360 = vmul.f32 %v359, %v357
    %v361 = vxor.u32 %v360, 2147483648
    %v362 = vsel %vm241, %v361, %v360
    %v363 = vsub.s32 4, %v339
    %v364 = vsel %vm241, %v363, %v339
    %v365 = vsel %vm240, %v83, %v362
    %v366 = vsel %vm240, 0, %v364
    %v367 = vmul.f32 %v365, %v365
    %v368 = vmul.f32 %v367, -0.001358992
    %v369 = vadd.f32 %v368, 0.041655596
    %v370 = vmul.f32 %v367, %v369
    %v371 = vadd.f32 %v370, -0.4999988
    %v372 = vmul.f32 %v367, %v371
    %v373 = vadd.f32 1.0, %v372
    %v374 = vmul.f32 %v365, %v365
    %v375 = vmul.f32 %v374, -0.00019511016
    %v376 = vadd.f32 %v375, 0.008332121
    %v377 = vmul.f32 %v374, %v376
    %v378 = vadd.f32 %v377, -0.16666654
    %v379 = vmul.f32 %v374, %v378
    %v380 = vadd.f32 %v379, 1.0
    %v381 = vmul.f32 %v380, %v365
    %vm382 = vweird.f32 %v83
    %v383 = vand.u32 %v366, 3
    %vm384 = vcmp.lt.s32.totalorder %v383, 2
    %vm385 = vcmp.eq.s32.totalorder %v383, 0
    %v386 = vxor.u32 %v381, 2147483648
    %v387 = vsel %vm385, %v373, %v386
    %vm388 = vcmp.eq.s32.totalorder %v383, 2
    %v389 = vxor.u32 %v373, 2147483648
    %v390 = vsel %vm388, %v389, %v381
    %v391 = vsel %vm384, %v387, %v390
    %v392 = vsel %vm382, nan, %v391
    %v393 = vpack.c.bf16 %v238, %v238
    %v394 = vpack.c.bf16 %v392, %v392
    %v395 = vld [vmem:[%s2] sm:$0xff]
    %v396 = vld [vmem:[%s2 + $0x8] sm:$0xff]
    %v397 = vld [vmem:[%s2 + $0x10] sm:$0xff]
    %v398 = vld [vmem:[%s2 + $0x18] sm:$0xff]
    %v399 = vld [vmem:[%s2 + $0x20] sm:$0xff]
    %v400 = vld [vmem:[%s2 + $0x28] sm:$0xff]
    %v401 = vld [vmem:[%s2 + $0x30] sm:$0xff]
    %v402 = vld [vmem:[%s2 + $0x38] sm:$0xff]
    %v403 = vld [vmem:[%s2 + $0x40] sm:$0xff]
    %v404 = vld [vmem:[%s2 + $0x48] sm:$0xff]
    %v405 = vld [vmem:[%s2 + $0x50] sm:$0xff]
    %v406 = vld [vmem:[%s2 + $0x58] sm:$0xff]
    %v407 = vld [vmem:[%s2 + $0x60] sm:$0xff]
    %v408 = vld [vmem:[%s2 + $0x68] sm:$0xff]
    %v409 = vld [vmem:[%s2 + $0x70] sm:$0xff]
    %v410 = vld [vmem:[%s2 + $0x78] sm:$0xff]
    %v411 = vld [vmem:[%s2 + $0x80] sm:$0xff]
    %v412 = vld [vmem:[%s2 + $0x88] sm:$0xff]
    %v413 = vld [vmem:[%s2 + $0x90] sm:$0xff]
    %v414 = vld [vmem:[%s2 + $0x98] sm:$0xff]
    %v415 = vld [vmem:[%s2 + $0xa0] sm:$0xff]
    %v416 = vld [vmem:[%s2 + $0xa8] sm:$0xff]
    %v417 = vld [vmem:[%s2 + $0xb0] sm:$0xff]
    %v418 = vld [vmem:[%s2 + $0xb8] sm:$0xff]
    %v419 = vld [vmem:[%s2 + $0xc0] sm:$0xff]
    %v420 = vld [vmem:[%s2 + $0xc8] sm:$0xff]
    %v421 = vld [vmem:[%s2 + $0xd0] sm:$0xff]
    %v422 = vld [vmem:[%s2 + $0xd8] sm:$0xff]
    %v423 = vld [vmem:[%s2 + $0xe0] sm:$0xff]
    %v424 = vld [vmem:[%s2 + $0xe8] sm:$0xff]
    %v425 = vld [vmem:[%s2 + $0xf0] sm:$0xff]
    %v426 = vld [vmem:[%s2 + $0xf8] sm:$0xff]
    %v427 = vld [vmem:[%s3] sm:$0x3]
    %v429 = vperm.slane %v427, 0
    %v430 = vperm.slane %v427, 1
    %v465 = vunpack.c.l.b16 %v395
    %v466 = vunpack.c.h.b16 %v395
    %v467 = vunpack.c.l.b16 %v396
    %v468 = vunpack.c.h.b16 %v396
    %v469 = vunpack.c.l.b16 %v397
    %v470 = vunpack.c.h.b16 %v397
    %v471 = vunpack.c.l.b16 %v398
    %v472 = vunpack.c.h.b16 %v398
    %v473 = vunpack.c.l.b16 %v399
    %v474 = vunpack.c.h.b16 %v399
    %v475 = vunpack.c.l.b16 %v400
    %v476 = vunpack.c.h.b16 %v400
    %v477 = vunpack.c.l.b16 %v401
    %v478 = vunpack.c.h.b16 %v401
    %v479 = vunpack.c.l.b16 %v402
    %v480 = vunpack.c.h.b16 %v402
    %v481 = vunpack.c.l.b16 %v403
    %v482 = vunpack.c.h.b16 %v403
    %v483 = vunpack.c.l.b16 %v404
    %v484 = vunpack.c.h.b16 %v404
    %v485 = vunpack.c.l.b16 %v405
    %v486 = vunpack.c.h.b16 %v405
    %v487 = vunpack.c.l.b16 %v406
    %v488 = vunpack.c.h.b16 %v406
    %v489 = vunpack.c.l.b16 %v407
    %v490 = vunpack.c.h.b16 %v407
    %v491 = vunpack.c.l.b16 %v408
    %v492 = vunpack.c.h.b16 %v408
    %v493 = vunpack.c.l.b16 %v409
    %v494 = vunpack.c.h.b16 %v409
    %v495 = vunpack.c.l.b16 %v410
    %v496 = vunpack.c.h.b16 %v410
    %v497 = vunpack.c.l.b16 %v411
    %v498 = vunpack.c.h.b16 %v411
    %v499 = vunpack.c.l.b16 %v412
    %v500 = vunpack.c.h.b16 %v412
    %v501 = vunpack.c.l.b16 %v413
    %v502 = vunpack.c.h.b16 %v413
    %v503 = vunpack.c.l.b16 %v414
    %v504 = vunpack.c.h.b16 %v414
    %v505 = vunpack.c.l.b16 %v415
    %v506 = vunpack.c.h.b16 %v415
    %v507 = vunpack.c.l.b16 %v416
    %v508 = vunpack.c.h.b16 %v416
    %v509 = vunpack.c.l.b16 %v417
    %v510 = vunpack.c.h.b16 %v417
    %v511 = vunpack.c.l.b16 %v418
    %v512 = vunpack.c.h.b16 %v418
    %v513 = vunpack.c.l.b16 %v419
    %v514 = vunpack.c.h.b16 %v419
    %v515 = vunpack.c.l.b16 %v420
    %v516 = vunpack.c.h.b16 %v420
    %v517 = vunpack.c.l.b16 %v421
    %v518 = vunpack.c.h.b16 %v421
    %v519 = vunpack.c.l.b16 %v422
    %v520 = vunpack.c.h.b16 %v422
    %v521 = vunpack.c.l.b16 %v423
    %v522 = vunpack.c.h.b16 %v423
    %v523 = vunpack.c.l.b16 %v424
    %v524 = vunpack.c.h.b16 %v424
    %v525 = vunpack.c.l.b16 %v425
    %v526 = vunpack.c.h.b16 %v425
    %v527 = vunpack.c.l.b16 %v426
    %v528 = vunpack.c.h.b16 %v426
    %v529 = vpack.c.b16 %v467, %v465
    %v530 = vpack.c.b16 %v468, %v466
    %v531 = vpack.c.b16 %v471, %v469
    %v532 = vpack.c.b16 %v472, %v470
    %v533 = vpack.c.b16 %v475, %v473
    %v534 = vpack.c.b16 %v476, %v474
    %v535 = vpack.c.b16 %v479, %v477
    %v536 = vpack.c.b16 %v480, %v478
    %v537 = vpack.c.b16 %v483, %v481
    %v538 = vpack.c.b16 %v484, %v482
    %v539 = vpack.c.b16 %v487, %v485
    %v540 = vpack.c.b16 %v488, %v486
    %v541 = vpack.c.b16 %v491, %v489
    %v542 = vpack.c.b16 %v492, %v490
    %v543 = vpack.c.b16 %v495, %v493
    %v544 = vpack.c.b16 %v496, %v494
    %v545 = vpack.c.b16 %v499, %v497
    %v546 = vpack.c.b16 %v500, %v498
    %v547 = vpack.c.b16 %v503, %v501
    %v548 = vpack.c.b16 %v504, %v502
    %v549 = vpack.c.b16 %v507, %v505
    %v550 = vpack.c.b16 %v508, %v506
    %v551 = vpack.c.b16 %v511, %v509
    %v552 = vpack.c.b16 %v512, %v510
    %v553 = vpack.c.b16 %v515, %v513
    %v554 = vpack.c.b16 %v516, %v514
    %v555 = vpack.c.b16 %v519, %v517
    %v556 = vpack.c.b16 %v520, %v518
    %v557 = vpack.c.b16 %v523, %v521
    %v558 = vpack.c.b16 %v524, %v522
    %v559 = vpack.c.b16 %v527, %v525
    %v560 = vpack.c.b16 %v528, %v526
    %593 = vmatpush.bf16.msra.mxu0 %v543
    %594 = vmatpush.bf16.msra.mxu0 %v541
    %595 = vmatpush.bf16.msra.mxu0 %v539
    %596 = vmatpush.bf16.msra.mxu0 %v537
    %597 = vmatpush.bf16.msra.mxu0 %v535
    %598 = vmatpush.bf16.msra.mxu0 %v533
    %599 = vmatpush.bf16.msra.mxu0 %v531
    %600 = vmatpush.bf16.msra.mxu0 %v529
    %601 = vmatmul.bf16.gmra.mxu0 %v393
    %v602 = vpop.f32.mrf.mxu0
    %v603 = vadd.f32 %v429, %v602
    %v604 = vpop.f32.mrf.mxu0
    %605 = vdwg.mxu0
    %606 = vmatpush.bf16.msra.mxu0 %v559
    %607 = vmatpush.bf16.msra.mxu0 %v557
    %608 = vmatpush.bf16.msra.mxu0 %v555
    %609 = vmatpush.bf16.msra.mxu0 %v553
    %610 = vmatpush.bf16.msra.mxu0 %v551
    %611 = vmatpush.bf16.msra.mxu0 %v549
    %612 = vmatpush.bf16.msra.mxu0 %v547
    %613 = vmatpush.bf16.msra.mxu0 %v545
    %614 = vmatmul.bf16.gmra.mxu0 %v394
    %v615 = vpop.f32.mrf.mxu0
    %v616 = vadd.f32 %v603, %v615
    %v617 = vpop.f32.mrf.mxu0
    %618 = vdwg.mxu0
    %619 = vmatpush.bf16.msra.mxu0 %v544
    %620 = vmatpush.bf16.msra.mxu0 %v542
    %621 = vmatpush.bf16.msra.mxu0 %v540
    %622 = vmatpush.bf16.msra.mxu0 %v538
    %623 = vmatpush.bf16.msra.mxu0 %v536
    %624 = vmatpush.bf16.msra.mxu0 %v534
    %625 = vmatpush.bf16.msra.mxu0 %v532
    %626 = vmatpush.bf16.msra.mxu0 %v530
    %627 = vmatmul.bf16.gmra.mxu0 %v393
    %v628 = vpop.f32.mrf.mxu0
    %v629 = vadd.f32 %v430, %v628
    %v630 = vpop.f32.mrf.mxu0
    %631 = vdwg.mxu0
    %632 = vmatpush.bf16.msra.mxu0 %v560
    %633 = vmatpush.bf16.msra.mxu0 %v558
    %634 = vmatpush.bf16.msra.mxu0 %v556
    %635 = vmatpush.bf16.msra.mxu0 %v554
    %636 = vmatpush.bf16.msra.mxu0 %v552
    %637 = vmatpush.bf16.msra.mxu0 %v550
    %638 = vmatpush.bf16.msra.mxu0 %v548
    %639 = vmatpush.bf16.msra.mxu0 %v546
    %640 = vmatmul.bf16.gmra.mxu0 %v394
    %v641 = vpop.f32.mrf.mxu0
    %v642 = vadd.f32 %v629, %v641
    %v643 = vpop.f32.mrf.mxu0
    %644 = vdwg.mxu0
    %v645 = vmax.f32 %v616, 0.0
    %v646 = vmax.f32 %v642, 0.0
    %v647 = vld [vmem:[%s4] sm:$0xff]
    %v648 = vld [vmem:[%s4 + $0x8] sm:$0xff]
    %v649 = vld [vmem:[%s4 + $0x10] sm:$0xff]
    %v650 = vld [vmem:[%s4 + $0x18] sm:$0xff]
    %v651 = vld [vmem:[%s4 + $0x20] sm:$0xff]
    %v652 = vld [vmem:[%s4 + $0x28] sm:$0xff]
    %v653 = vpack.c.bf16 %v648, %v647
    %v654 = vpack.c.bf16 %v650, %v649
    %v655 = vpack.c.bf16 %v652, %v651
    %v656 = vld [vmem:[%s5] sm:$0xf]
    %v657 = vld [vmem:[%s5 + $0x4] sm:$0xf]
    %v658 = vld [vmem:[%s5 + $0x8] sm:$0xf]
    %v659 = vpack.c.bf16 %v645, %v645
    %v660 = vpack.c.bf16 %v646, %v646
    %v661 = vld [vmem:[#allocation4] sm:$0xff]
    %v662 = vld [vmem:[#allocation4 + $0x8] sm:$0xf]
    %v663 = vld [vmem:[#allocation4 + $0xc] sm:$0xff]
    %v664 = vld [vmem:[#allocation4 + $0x14] sm:$0xf]
    %v665 = vld [vmem:[#allocation4 + $0x18] sm:$0xff]
    %v666 = vld [vmem:[#allocation4 + $0x20] sm:$0xf]
    %v667 = vld [vmem:[#allocation4 + $0x24] sm:$0xff]
    %v668 = vld [vmem:[#allocation4 + $0x2c] sm:$0xf]
    %v669 = vld [vmem:[#allocation4 + $0x30] sm:$0xff]
    %v670 = vld [vmem:[#allocation4 + $0x38] sm:$0xf]
    %v671 = vld [vmem:[#allocation4 + $0x3c] sm:$0xff]
    %v672 = vld [vmem:[#allocation4 + $0x44] sm:$0xf]
    %v673 = vld [vmem:[#allocation4 + $0x48] sm:$0xff]
    %v674 = vld [vmem:[#allocation4 + $0x50] sm:$0xf]
    %v675 = vld [vmem:[#allocation4 + $0x54] sm:$0xff]
    %v676 = vld [vmem:[#allocation4 + $0x5c] sm:$0xf]
    %v677 = vld [vmem:[#allocation4 + $0x60] sm:$0xff]
    %v678 = vld [vmem:[#allocation4 + $0x68] sm:$0xf]
    %v679 = vld [vmem:[#allocation4 + $0x6c] sm:$0xff]
    %v680 = vld [vmem:[#allocation4 + $0x74] sm:$0xf]
    %v681 = vld [vmem:[#allocation4 + $0x78] sm:$0xff]
    %v682 = vld [vmem:[#allocation4 + $0x80] sm:$0xf]
    %v683 = vld [vmem:[#allocation4 + $0x84] sm:$0xff]
    %v684 = vld [vmem:[#allocation4 + $0x8c] sm:$0xf]
    %v685 = vld [vmem:[#allocation4 + $0x90] sm:$0xff]
    %v686 = vld [vmem:[#allocation4 + $0x98] sm:$0xf]
    %v687 = vld [vmem:[#allocation4 + $0x9c] sm:$0xff]
    %v688 = vld [vmem:[#allocation4 + $0xa4] sm:$0xf]
    %v689 = vld [vmem:[#allocation4 + $0xa8] sm:$0xff]
    %v690 = vld [vmem:[#allocation4 + $0xb0] sm:$0xf]
    %v691 = vld [vmem:[#allocation4 + $0xb4] sm:$0xff]
    %v692 = vld [vmem:[#allocation4 + $0xbc] sm:$0xf]
    %v693 = vld [vmem:[#allocation4 + $0xc0] sm:$0xff]
    %v694 = vld [vmem:[#allocation4 + $0xc8] sm:$0xf]
    %v695 = vld [vmem:[#allocation4 + $0xcc] sm:$0xff]
    %v696 = vld [vmem:[#allocation4 + $0xd4] sm:$0xf]
    %v697 = vld [vmem:[#allocation4 + $0xd8] sm:$0xff]
    %v698 = vld [vmem:[#allocation4 + $0xe0] sm:$0xf]
    %v699 = vld [vmem:[#allocation4 + $0xe4] sm:$0xff]
    %v700 = vld [vmem:[#allocation4 + $0xec] sm:$0xf]
    %v701 = vld [vmem:[#allocation4 + $0xf0] sm:$0xff]
    %v702 = vld [vmem:[#allocation4 + $0xf8] sm:$0xf]
    %v703 = vld [vmem:[#allocation4 + $0xfc] sm:$0xff]
    %v704 = vld [vmem:[#allocation4 + $0x104] sm:$0xf]
    %v705 = vld [vmem:[#allocation4 + $0x108] sm:$0xff]
    %v706 = vld [vmem:[#allocation4 + $0x110] sm:$0xf]
    %v707 = vld [vmem:[#allocation4 + $0x114] sm:$0xff]
    %v708 = vld [vmem:[#allocation4 + $0x11c] sm:$0xf]
    %v709 = vld [vmem:[#allocation4 + $0x120] sm:$0xff]
    %v710 = vld [vmem:[#allocation4 + $0x128] sm:$0xf]
    %v711 = vld [vmem:[#allocation4 + $0x12c] sm:$0xff]
    %v712 = vld [vmem:[#allocation4 + $0x134] sm:$0xf]
    %v713 = vld [vmem:[#allocation4 + $0x138] sm:$0xff]
    %v714 = vld [vmem:[#allocation4 + $0x140] sm:$0xf]
    %v715 = vld [vmem:[#allocation4 + $0x144] sm:$0xff]
    %v716 = vld [vmem:[#allocation4 + $0x14c] sm:$0xf]
    %v717 = vld [vmem:[#allocation4 + $0x150] sm:$0xff]
    %v718 = vld [vmem:[#allocation4 + $0x158] sm:$0xf]
    %v719 = vld [vmem:[#allocation4 + $0x15c] sm:$0xff]
    %v720 = vld [vmem:[#allocation4 + $0x164] sm:$0xf]
    %v721 = vld [vmem:[#allocation4 + $0x168] sm:$0xff]
    %v722 = vld [vmem:[#allocation4 + $0x170] sm:$0xf]
    %v723 = vld [vmem:[#allocation4 + $0x174] sm:$0xff]
    %v724 = vld [vmem:[#allocation4 + $0x17c] sm:$0xf]
    %v789 = vunpack.c.l.b16 %v661
    %v790 = vunpack.c.h.b16 %v661
    %v791 = vunpack.c.l.b16 %v662
    %v792 = vunpack.c.l.b16 %v663
    %v793 = vunpack.c.h.b16 %v663
    %v794 = vunpack.c.l.b16 %v664
    %v795 = vunpack.c.l.b16 %v665
    %v796 = vunpack.c.h.b16 %v665
    %v797 = vunpack.c.l.b16 %v666
    %v798 = vunpack.c.l.b16 %v667
    %v799 = vunpack.c.h.b16 %v667
    %v800 = vunpack.c.l.b16 %v668
    %v801 = vunpack.c.l.b16 %v669
    %v802 = vunpack.c.h.b16 %v669
    %v803 = vunpack.c.l.b16 %v670
    %v804 = vunpack.c.l.b16 %v671
    %v805 = vunpack.c.h.b16 %v671
    %v806 = vunpack.c.l.b16 %v672
    %v807 = vunpack.c.l.b16 %v673
    %v808 = vunpack.c.h.b16 %v673
    %v809 = vunpack.c.l.b16 %v674
    %v810 = vunpack.c.l.b16 %v675
    %v811 = vunpack.c.h.b16 %v675
    %v812 = vunpack.c.l.b16 %v676
    %v813 = vunpack.c.l.b16 %v677
    %v814 = vunpack.c.h.b16 %v677
    %v815 = vunpack.c.l.b16 %v678
    %v816 = vunpack.c.l.b16 %v679
    %v817 = vunpack.c.h.b16 %v679
    %v818 = vunpack.c.l.b16 %v680
    %v819 = vunpack.c.l.b16 %v681
    %v820 = vunpack.c.h.b16 %v681
    %v821 = vunpack.c.l.b16 %v682
    %v822 = vunpack.c.l.b16 %v683
    %v823 = vunpack.c.h.b16 %v683
    %v824 = vunpack.c.l.b16 %v684
    %v825 = vunpack.c.l.b16 %v685
    %v826 = vunpack.c.h.b16 %v685
    %v827 = vunpack.c.l.b16 %v686
    %v828 = vunpack.c.l.b16 %v687
    %v829 = vunpack.c.h.b16 %v687
    %v830 = vunpack.c.l.b16 %v688
    %v831 = vunpack.c.l.b16 %v689
    %v832 = vunpack.c.h.b16 %v689
    %v833 = vunpack.c.l.b16 %v690
    %v834 = vunpack.c.l.b16 %v691
    %v835 = vunpack.c.h.b16 %v691
    %v836 = vunpack.c.l.b16 %v692
    %v837 = vunpack.c.l.b16 %v693
    %v838 = vunpack.c.h.b16 %v693
    %v839 = vunpack.c.l.b16 %v694
    %v840 = vunpack.c.l.b16 %v695
    %v841 = vunpack.c.h.b16 %v695
    %v842 = vunpack.c.l.b16 %v696
    %v843 = vunpack.c.l.b16 %v697
    %v844 = vunpack.c.h.b16 %v697
    %v845 = vunpack.c.l.b16 %v698
    %v846 = vunpack.c.l.b16 %v699
    %v847 = vunpack.c.h.b16 %v699
    %v848 = vunpack.c.l.b16 %v700
    %v849 = vunpack.c.l.b16 %v701
    %v850 = vunpack.c.h.b16 %v701
    %v851 = vunpack.c.l.b16 %v702
    %v852 = vunpack.c.l.b16 %v703
    %v853 = vunpack.c.h.b16 %v703
    %v854 = vunpack.c.l.b16 %v704
    %v855 = vunpack.c.l.b16 %v705
    %v856 = vunpack.c.h.b16 %v705
    %v857 = vunpack.c.l.b16 %v706
    %v858 = vunpack.c.l.b16 %v707
    %v859 = vunpack.c.h.b16 %v707
    %v860 = vunpack.c.l.b16 %v708
    %v861 = vunpack.c.l.b16 %v709
    %v862 = vunpack.c.h.b16 %v709
    %v863 = vunpack.c.l.b16 %v710
    %v864 = vunpack.c.l.b16 %v711
    %v865 = vunpack.c.h.b16 %v711
    %v866 = vunpack.c.l.b16 %v712
    %v867 = vunpack.c.l.b16 %v713
    %v868 = vunpack.c.h.b16 %v713
    %v869 = vunpack.c.l.b16 %v714
    %v870 = vunpack.c.l.b16 %v715
    %v871 = vunpack.c.h.b16 %v715
    %v872 = vunpack.c.l.b16 %v716
    %v873 = vunpack.c.l.b16 %v717
    %v874 = vunpack.c.h.b16 %v717
    %v875 = vunpack.c.l.b16 %v718
    %v876 = vunpack.c.l.b16 %v719
    %v877 = vunpack.c.h.b16 %v719
    %v878 = vunpack.c.l.b16 %v720
    %v879 = vunpack.c.l.b16 %v721
    %v880 = vunpack.c.h.b16 %v721
    %v881 = vunpack.c.l.b16 %v722
    %v882 = vunpack.c.l.b16 %v723
    %v883 = vunpack.c.h.b16 %v723
    %v884 = vunpack.c.l.b16 %v724
    %v885 = vpack.c.b16 %v792, %v789
    %v886 = vpack.c.b16 %v793, %v790
    %v887 = vpack.c.b16 %v794, %v791
    %v888 = vpack.c.b16 %v798, %v795
    %v889 = vpack.c.b16 %v799, %v796
    %v890 = vpack.c.b16 %v800, %v797
    %v891 = vpack.c.b16 %v804, %v801
    %v892 = vpack.c.b16 %v805, %v802
    %v893 = vpack.c.b16 %v806, %v803
    %v894 = vpack.c.b16 %v810, %v807
    %v895 = vpack.c.b16 %v811, %v808
    %v896 = vpack.c.b16 %v812, %v809
    %v897 = vpack.c.b16 %v816, %v813
    %v898 = vpack.c.b16 %v817, %v814
    %v899 = vpack.c.b16 %v818, %v815
    %v900 = vpack.c.b16 %v822, %v819
    %v901 = vpack.c.b16 %v823, %v820
    %v902 = vpack.c.b16 %v824, %v821
    %v903 = vpack.c.b16 %v828, %v825
    %v904 = vpack.c.b16 %v829, %v826
    %v905 = vpack.c.b16 %v830, %v827
    %v906 = vpack.c.b16 %v834, %v831
    %v907 = vpack.c.b16 %v835, %v832
    %v908 = vpack.c.b16 %v836, %v833
    %v909 = vpack.c.b16 %v840, %v837
    %v910 = vpack.c.b16 %v841, %v838
    %v911 = vpack.c.b16 %v842, %v839
    %v912 = vpack.c.b16 %v846, %v843
    %v913 = vpack.c.b16 %v847, %v844
    %v914 = vpack.c.b16 %v848, %v845
    %v915 = vpack.c.b16 %v852, %v849
    %v916 = vpack.c.b16 %v853, %v850
    %v917 = vpack.c.b16 %v854, %v851
    %v918 = vpack.c.b16 %v858, %v855
    %v919 = vpack.c.b16 %v859, %v856
    %v920 = vpack.c.b16 %v860, %v857
    %v921 = vpack.c.b16 %v864, %v861
    %v922 = vpack.c.b16 %v865, %v862
    %v923 = vpack.c.b16 %v866, %v863
    %v924 = vpack.c.b16 %v870, %v867
    %v925 = vpack.c.b16 %v871, %v868
    %v926 = vpack.c.b16 %v872, %v869
    %v927 = vpack.c.b16 %v876, %v873
    %v928 = vpack.c.b16 %v877, %v874
    %v929 = vpack.c.b16 %v878, %v875
    %v930 = vpack.c.b16 %v882, %v879
    %v931 = vpack.c.b16 %v883, %v880
    %v932 = vpack.c.b16 %v884, %v881
    %981 = vmatpush.bf16.msra.mxu0 %v906
    %982 = vmatpush.bf16.msra.mxu0 %v903
    %983 = vmatpush.bf16.msra.mxu0 %v900
    %984 = vmatpush.bf16.msra.mxu0 %v897
    %985 = vmatpush.bf16.msra.mxu0 %v894
    %986 = vmatpush.bf16.msra.mxu0 %v891
    %987 = vmatpush.bf16.msra.mxu0 %v888
    %988 = vmatpush.bf16.msra.mxu0 %v885
    %989 = vmatmul.bf16.gmra.mxu0 %v659
    %v990 = vpop.f32.mrf.mxu0
    %v991 = vadd.f32 0.0, %v990
    %v992 = vpop.f32.mrf.mxu0
    %993 = vdwg.mxu0
    %994 = vmatpush.bf16.msra.mxu0 %v930
    %995 = vmatpush.bf16.msra.mxu0 %v927
    %996 = vmatpush.bf16.msra.mxu0 %v924
    %997 = vmatpush.bf16.msra.mxu0 %v921
    %998 = vmatpush.bf16.msra.mxu0 %v918
    %999 = vmatpush.bf16.msra.mxu0 %v915
    %1000 = vmatpush.bf16.msra.mxu0 %v912
    %1001 = vmatpush.bf16.msra.mxu0 %v909
    %1002 = vmatmul.bf16.gmra.mxu0 %v660
    %v1003 = vpop.f32.mrf.mxu0
    %v1004 = vadd.f32 %v991, %v1003
    %v1005 = vpop.f32.mrf.mxu0
    %1006 = vdwg.mxu0
    %1007 = vmatpush.bf16.msra.mxu0 %v907
    %1008 = vmatpush.bf16.msra.mxu0 %v904
    %1009 = vmatpush.bf16.msra.mxu0 %v901
    %1010 = vmatpush.bf16.msra.mxu0 %v898
    %1011 = vmatpush.bf16.msra.mxu0 %v895
    %1012 = vmatpush.bf16.msra.mxu0 %v892
    %1013 = vmatpush.bf16.msra.mxu0 %v889
    %1014 = vmatpush.bf16.msra.mxu0 %v886
    %1015 = vmatmul.bf16.gmra.mxu0 %v659
    %v1016 = vpop.f32.mrf.mxu0
    %v1017 = vadd.f32 0.0, %v1016
    %v1018 = vpop.f32.mrf.mxu0
    %1019 = vdwg.mxu0
    %1020 = vmatpush.bf16.msra.mxu0 %v931
    %1021 = vmatpush.bf16.msra.mxu0 %v928
    %1022 = vmatpush.bf16.msra.mxu0 %v925
    %1023 = vmatpush.bf16.msra.mxu0 %v922
    %1024 = vmatpush.bf16.msra.mxu0 %v919
    %1025 = vmatpush.bf16.msra.mxu0 %v916
    %1026 = vmatpush.bf16.msra.mxu0 %v913
    %1027 = vmatpush.bf16.msra.mxu0 %v910
    %1028 = vmatmul.bf16.gmra.mxu0 %v660
    %v1029 = vpop.f32.mrf.mxu0
    %v1030 = vadd.f32 %v1017, %v1029
    %v1031 = vpop.f32.mrf.mxu0
    %1032 = vdwg.mxu0
    %1033 = vmatpush.bf16.msra.mxu0 %v908
    %1034 = vmatpush.bf16.msra.mxu0 %v905
    %1035 = vmatpush.bf16.msra.mxu0 %v902
    %1036 = vmatpush.bf16.msra.mxu0 %v899
    %1037 = vmatpush.bf16.msra.mxu0 %v896
    %1038 = vmatpush.bf16.msra.mxu0 %v893
    %1039 = vmatpush.bf16.msra.mxu0 %v890
    %1040 = vmatpush.bf16.msra.mxu0 %v887
    %1041 = vmatmul.bf16.gmra.mxu0 %v659
    %v1042 = vpop.f32.mrf.mxu0
    %v1043 = vadd.f32 0.0, %v1042
    %v1044 = vpop.f32.mrf.mxu0
    %1045 = vdwg.mxu0
    %1046 = vmatpush.bf16.msra.mxu0 %v932
    %1047 = vmatpush.bf16.msra.mxu0 %v929
    %1048 = vmatpush.bf16.msra.mxu0 %v926
    %1049 = vmatpush.bf16.msra.mxu0 %v923
    %1050 = vmatpush.bf16.msra.mxu0 %v920
    %1051 = vmatpush.bf16.msra.mxu0 %v917
    %1052 = vmatpush.bf16.msra.mxu0 %v914
    %1053 = vmatpush.bf16.msra.mxu0 %v911
    %1054 = vmatmul.bf16.gmra.mxu0 %v660
    %v1055 = vpop.f32.mrf.mxu0
    %v1056 = vadd.f32 %v1043, %v1055
    %v1057 = vpop.f32.mrf.mxu0
    %1058 = vdwg.mxu0
    %vm1059 = vcmask 64512
    %v1061 = vsel %vm1059, %v66, 0
    %v1064 = vsel %vm1059, %v67, 0
    %v1067 = vsel %vm1059, %v68, 0
    %v1070 = vsel %vm1059, %v69, 0
    %v1073 = vsel %vm1059, %v70, 0
    %v1076 = vsel %vm1059, %v71, 0
    %1078 = vmatpush.msra.mxu0 0.0
    %1079 = vmatpush.msra.mxu0 0.0
    %1080 = vmatpush.msra.mxu0 0.0
    %1081 = vmatpush.msra.mxu0 0.0
    %1082 = vmatpush.msra.mxu0 0.0
    %1083 = vmatpush.msra.mxu0 0.0
    %1084 = vmatpush.msra.mxu0 0.0
    %1085 = vmatpush.msra.mxu0 0.0
    %1086 = vmatpush.msra.mxu0 0.0
    %1087 = vmatpush.msra.mxu0 0.0
    %1088 = vmatpush.msra.mxu0 0.0
    %1089 = vmatpush.msra.mxu0 0.0
    %1090 = vmatpush.msra.mxu0 0.0
    %1091 = vmatpush.msra.mxu0 0.0
    %1092 = vmatpush.msra.mxu0 0.0
    %1093 = vmatpush.msra.mxu0 %v1004
    %1094 = vmatmul.f32.gmra.mxu0 %v1061
    %v1095 = vpop.f32.mrf.mxu0
    %v1096 = vadd.f32 0.0, %v1095
    %1097 = vmatmul.f32.gmra.mxu0 %v1064
    %v1098 = vpop.f32.mrf.mxu0
    %v1099 = vadd.f32 0.0, %v1098
    %1100 = vmatmul.f32.gmra.mxu0 %v1067
    %v1101 = vpop.f32.mrf.mxu0
    %v1102 = vadd.f32 0.0, %v1101
    %1103 = vmatmul.f32.gmra.mxu0 %v1070
    %v1104 = vpop.f32.mrf.mxu0
    %v1105 = vadd.f32 0.0, %v1104
    %1106 = vmatmul.f32.gmra.mxu0 %v1073
    %v1107 = vpop.f32.mrf.mxu0
    %v1108 = vadd.f32 0.0, %v1107
    %1109 = vmatmul.f32.gmra.mxu0 %v1076
    %v1110 = vpop.f32.mrf.mxu0
    %v1111 = vadd.f32 0.0, %v1110
    %1112 = vdwg.mxu0
    %1113 = vmatpush.msra.mxu0 0.0
    %1114 = vmatpush.msra.mxu0 0.0
    %1115 = vmatpush.msra.mxu0 0.0
    %1116 = vmatpush.msra.mxu0 0.0
    %1117 = vmatpush.msra.mxu0 0.0
    %1118 = vmatpush.msra.mxu0 0.0
    %1119 = vmatpush.msra.mxu0 0.0
    %1120 = vmatpush.msra.mxu0 0.0
    %1121 = vmatpush.msra.mxu0 0.0
    %1122 = vmatpush.msra.mxu0 0.0
    %1123 = vmatpush.msra.mxu0 0.0
    %1124 = vmatpush.msra.mxu0 0.0
    %1125 = vmatpush.msra.mxu0 0.0
    %1126 = vmatpush.msra.mxu0 0.0
    %1127 = vmatpush.msra.mxu0 0.0
    %1128 = vmatpush.msra.mxu0 %v1030
    %1129 = vmatmul.f32.gmra.mxu0 %v1061
    %v1130 = vpop.f32.mrf.mxu0
    %v1131 = vadd.f32 0.0, %v1130
    %1132 = vmatmul.f32.gmra.mxu0 %v1064
    %v1133 = vpop.f32.mrf.mxu0
    %v1134 = vadd.f32 0.0, %v1133
    %1135 = vmatmul.f32.gmra.mxu0 %v1067
    %v1136 = vpop.f32.mrf.mxu0
    %v1137 = vadd.f32 0.0, %v1136
    %1138 = vmatmul.f32.gmra.mxu0 %v1070
    %v1139 = vpop.f32.mrf.mxu0
    %v1140 = vadd.f32 0.0, %v1139
    %1141 = vmatmul.f32.gmra.mxu0 %v1073
    %v1142 = vpop.f32.mrf.mxu0
    %v1143 = vadd.f32 0.0, %v1142
    %1144 = vmatmul.f32.gmra.mxu0 %v1076
    %v1145 = vpop.f32.mrf.mxu0
    %v1146 = vadd.f32 0.0, %v1145
    %1147 = vdwg.mxu0
    %1148 = vmatpush.msra.mxu0 0.0
    %1149 = vmatpush.msra.mxu0 0.0
    %1150 = vmatpush.msra.mxu0 0.0
    %1151 = vmatpush.msra.mxu0 0.0
    %1152 = vmatpush.msra.mxu0 0.0
    %1153 = vmatpush.msra.mxu0 0.0
    %1154 = vmatpush.msra.mxu0 0.0
    %1155 = vmatpush.msra.mxu0 0.0
    %1156 = vmatpush.msra.mxu0 0.0
    %1157 = vmatpush.msra.mxu0 0.0
    %1158 = vmatpush.msra.mxu0 0.0
    %1159 = vmatpush.msra.mxu0 0.0
    %1160 = vmatpush.msra.mxu0 0.0
    %1161 = vmatpush.msra.mxu0 0.0
    %1162 = vmatpush.msra.mxu0 0.0
    %1163 = vmatpush.msra.mxu0 %v1056
    %1164 = vmatmul.f32.gmra.mxu0 %v1061
    %v1165 = vpop.f32.mrf.mxu0
    %v1166 = vadd.f32 0.0, %v1165
    %1167 = vmatmul.f32.gmra.mxu0 %v1064
    %v1168 = vpop.f32.mrf.mxu0
    %v1169 = vadd.f32 0.0, %v1168
    %1170 = vmatmul.f32.gmra.mxu0 %v1067
    %v1171 = vpop.f32.mrf.mxu0
    %v1172 = vadd.f32 0.0, %v1171
    %1173 = vmatmul.f32.gmra.mxu0 %v1070
    %v1174 = vpop.f32.mrf.mxu0
    %v1175 = vadd.f32 0.0, %v1174
    %1176 = vmatmul.f32.gmra.mxu0 %v1073
    %v1177 = vpop.f32.mrf.mxu0
    %v1178 = vadd.f32 0.0, %v1177
    %1179 = vmatmul.f32.gmra.mxu0 %v1076
    %v1180 = vpop.f32.mrf.mxu0
    %v1181 = vadd.f32 0.0, %v1180
    %1182 = vdwg.mxu0
    %v1186 = vunpack.c.l.b16 %v656
    %v1187 = vunpack.c.l.b16 %v657
    %v1188 = vunpack.c.l.b16 %v658
    %v1189 = vpack.c.b16 %v1187, %v1186
    %v1190 = vpack.c.b16 %v1188, %v1188
    %vm1192 = vcmask 195584
    %v1194 = vsel %vm1192, %v653, 0
    %v1197 = vsel %vm1192, %v654, 0
    %v1200 = vsel %vm1192, %v655, 0
    %vm1202 = vcmask 1043456
    %v1204 = vsel %vm1202, %v1190, 0
    %1206 = vmatpush.bf16.msra.mxu0 0
    %1207 = vmatpush.bf16.msra.mxu0 0
    %1208 = vmatpush.bf16.msra.mxu0 0
    %1209 = vmatpush.bf16.msra.mxu0 0
    %1210 = vmatpush.bf16.msra.mxu0 0
    %1211 = vmatpush.bf16.msra.mxu0 0
    %1212 = vmatpush.bf16.msra.mxu0 %v1204
    %1213 = vmatpush.bf16.msra.mxu0 %v1189
    %1214 = vmatmul.bf16.gmra.mxu0 %v1194
    %v1215 = vpop.f32.mrf.mxu0
    %v1216 = vadd.f32 %v1096, %v1215
    %v1217 = vpop.f32.mrf.mxu0
    %v1218 = vadd.f32 %v1099, %v1217
    %1219 = vmatmul.bf16.gmra.mxu0 %v1197
    %v1220 = vpop.f32.mrf.mxu0
    %v1221 = vadd.f32 %v1102, %v1220
    %v1222 = vpop.f32.mrf.mxu0
    %v1223 = vadd.f32 %v1105, %v1222
    %1224 = vmatmul.bf16.gmra.mxu0 %v1200
    %v1225 = vpop.f32.mrf.mxu0
    %v1226 = vadd.f32 %v1108, %v1225
    %v1227 = vpop.f32.mrf.mxu0
    %v1228 = vadd.f32 %v1111, %v1227
    %1229 = vdwg.mxu0
    %1230 = vset.pattern.permute.xlu0 9
    %1231 = vperm.xlu0 %1230, %v66
    %v1232 = vpop.permute.xlu0 %1231
    %1234 = vset.pattern.permute.xlu0 9
    %1235 = vperm.xlu0 %1234, %v67
    %v1236 = vpop.permute.xlu0 %1235
    %1238 = vset.pattern.permute.xlu0 9
    %1239 = vperm.xlu0 %1238, %v68
    %v1240 = vpop.permute.xlu0 %1239
    %1242 = vset.pattern.permute.xlu0 9
    %1243 = vperm.xlu0 %1242, %v69
    %v1244 = vpop.permute.xlu0 %1243
    %1246 = vset.pattern.permute.xlu0 9
    %1247 = vperm.xlu0 %1246, %v70
    %v1248 = vpop.permute.xlu0 %1247
    %1250 = vset.pattern.permute.xlu0 9
    %1251 = vperm.xlu0 %1250, %v71
    %v1252 = vpop.permute.xlu0 %1251
    %v1254 = vmul.f32 %v1232, %v1131
    %v1255 = vmul.f32 %v1236, %v1134
    %v1256 = vmul.f32 %v1240, %v1137
    %v1257 = vmul.f32 %v1244, %v1140
    %v1258 = vmul.f32 %v1248, %v1143
    %v1259 = vmul.f32 %v1252, %v1146
    %v1260 = vsub.f32 %v1216, %v1254
    %v1261 = vsub.f32 %v1218, %v1255
    %v1262 = vsub.f32 %v1221, %v1256
    %v1263 = vsub.f32 %v1223, %v1257
    %v1264 = vsub.f32 %v1226, %v1258
    %v1265 = vsub.f32 %v1228, %v1259
    %1266 = vset.pattern.permute.xlu0 10
    %1267 = vperm.xlu0 %1266, %v66
    %v1268 = vpop.permute.xlu0 %1267
    %1270 = vset.pattern.permute.xlu0 10
    %1271 = vperm.xlu0 %1270, %v67
    %v1272 = vpop.permute.xlu0 %1271
    %1274 = vset.pattern.permute.xlu0 10
    %1275 = vperm.xlu0 %1274, %v68
    %v1276 = vpop.permute.xlu0 %1275
    %1278 = vset.pattern.permute.xlu0 10
    %1279 = vperm.xlu0 %1278, %v69
    %v1280 = vpop.permute.xlu0 %1279
    %1282 = vset.pattern.permute.xlu0 10
    %1283 = vperm.xlu0 %1282, %v70
    %v1284 = vpop.permute.xlu0 %1283
    %1286 = vset.pattern.permute.xlu0 10
    %1287 = vperm.xlu0 %1286, %v71
    %v1288 = vpop.permute.xlu0 %1287
    %v1290 = vmul.f32 %v1268, %v1166
    %v1291 = vmul.f32 %v1272, %v1169
    %v1292 = vmul.f32 %v1276, %v1172
    %v1293 = vmul.f32 %v1280, %v1175
    %v1294 = vmul.f32 %v1284, %v1178
    %v1295 = vmul.f32 %v1288, %v1181
    %v1296 = vsub.f32 %v1260, %v1290
    %v1297 = vsub.f32 %v1261, %v1291
    %v1298 = vsub.f32 %v1262, %v1292
    %v1299 = vsub.f32 %v1263, %v1293
    %v1300 = vsub.f32 %v1264, %v1294
    %v1301 = vsub.f32 %v1265, %v1295
    %1302 = vset.pattern.permute.xlu0 8
    %1303 = vperm.xlu0 %1302, %v66
    %v1304 = vpop.permute.xlu0 %1303
    %1306 = vset.pattern.permute.xlu0 8
    %1307 = vperm.xlu0 %1306, %v67
    %v1308 = vpop.permute.xlu0 %1307
    %1310 = vset.pattern.permute.xlu0 8
    %1311 = vperm.xlu0 %1310, %v68
    %v1312 = vpop.permute.xlu0 %1311
    %1314 = vset.pattern.permute.xlu0 8
    %1315 = vperm.xlu0 %1314, %v69
    %v1316 = vpop.permute.xlu0 %1315
    %1318 = vset.pattern.permute.xlu0 8
    %1319 = vperm.xlu0 %1318, %v70
    %v1320 = vpop.permute.xlu0 %1319
    %1322 = vset.pattern.permute.xlu0 8
    %1323 = vperm.xlu0 %1322, %v71
    %v1324 = vpop.permute.xlu0 %1323
    %v1326 = vmul.f32 %v1296, %v1304
    %v1327 = vmul.f32 %v1297, %v1308
    %v1328 = vmul.f32 %v1298, %v1312
    %v1329 = vmul.f32 %v1299, %v1316
    %v1330 = vmul.f32 %v1300, %v1320
    %v1331 = vmul.f32 %v1301, %v1324
    %v1332 = vadd.f32 %v1326, %v1327
    %v1333 = vadd.f32 %v1332, %v1328
    %v1334 = vadd.f32 %v1333, %v1329
    %v1335 = vadd.f32 %v1334, %v1330
    %v1336 = vadd.f32 %v1335, %v1331
    %v1337 = vrot.slane %v1336, 4
    %v1338 = vadd.f32 %v1336, %v1337
    %v1339 = vrot.slane %v1338, 2
    %v1340 = vadd.f32 %v1338, %v1339
    %v1341 = vrot.slane %v1340, 1
    %v1342 = vadd.f32 %v1340, %v1341
    %v1343 = vmul.f32 %v1342, 0.03125
    %v1344 = vmul.f32 %v1326, %v1326
    %v1345 = vmul.f32 %v1327, %v1327
    %v1346 = vmul.f32 %v1328, %v1328
    %v1347 = vmul.f32 %v1329, %v1329
    %v1348 = vmul.f32 %v1330, %v1330
    %v1349 = vmul.f32 %v1331, %v1331
    %v1350 = vadd.f32 %v1344, %v1345
    %v1351 = vadd.f32 %v1350, %v1346
    %v1352 = vadd.f32 %v1351, %v1347
    %v1353 = vadd.f32 %v1352, %v1348
    %v1354 = vadd.f32 %v1353, %v1349
    %v1355 = vrot.slane %v1354, 4
    %v1356 = vadd.f32 %v1354, %v1355
    %v1357 = vrot.slane %v1356, 2
    %v1358 = vadd.f32 %v1356, %v1357
    %v1359 = vrot.slane %v1358, 1
    %v1360 = vadd.f32 %v1358, %v1359
    %v1361 = vmul.f32 %v1360, 0.03125
    %v1362 = vmul.f32 %v1343, %v1343
    %v1363 = vsub.f32 %v1361, %v1362
    %v1364 = vmax.f32 %v1363, 0.0
    %v1365 = vsub.f32 %v1326, %v1343
    %v1366 = vsub.f32 %v1327, %v1343
    %v1367 = vsub.f32 %v1328, %v1343
    %v1368 = vsub.f32 %v1329, %v1343
    %v1369 = vsub.f32 %v1330, %v1343
    %v1370 = vsub.f32 %v1331, %v1343
    %v1371 = vadd.f32 %v1364, 1e-05
    %v1372 = vrsqrt.pop %v1371
    %v1373 = vmul.f32 %v1372, %v1371
    %v1374 = vmul.f32 %v1373, %v1372
    %v1375 = vmul.f32 0.5, %v1374
    %v1376 = vsub.f32 1.5, %v1375
    %v1377 = vmul.f32 %v1372, %v1376
    %vm1378 = vweird.f32 %v1371
    %vm1379 = vweird.f32 %v1372
    %vm1380 = vmor %vm1378, %vm1379
    %v1381 = vsel %vm1380, %v1372, %v1377
    %v1382 = vmul.f32 %v1365, %v1381
    %v1383 = vmul.f32 %v1366, %v1381
    %v1384 = vmul.f32 %v1367, %v1381
    %v1385 = vmul.f32 %v1368, %v1381
    %v1386 = vmul.f32 %v1369, %v1381
    %v1387 = vmul.f32 %v1370, %v1381
    %v1388 = vperm.slane %v72, 0
    %v1389 = vmul.f32 %v1382, %v1388
    %v1390 = vmul.f32 %v1383, %v1388
    %v1391 = vmul.f32 %v1384, %v1388
    %v1392 = vmul.f32 %v1385, %v1388
    %v1393 = vmul.f32 %v1386, %v1388
    %v1394 = vmul.f32 %v1387, %v1388
    %v1395 = vperm.slane %v72, 1
    %v1396 = vadd.f32 %v1389, %v1395
    %v1397 = vadd.f32 %v1390, %v1395
    %v1398 = vadd.f32 %v1391, %v1395
    %v1399 = vadd.f32 %v1392, %v1395
    %v1400 = vadd.f32 %v1393, %v1395
    %v1401 = vadd.f32 %v1394, %v1395
    %v1402 = vmax.f32 %v1396, 0.0
    %v1403 = vmax.f32 %v1397, 0.0
    %v1404 = vmax.f32 %v1398, 0.0
    %v1405 = vmax.f32 %v1399, 0.0
    %v1406 = vmax.f32 %v1400, 0.0
    %v1407 = vmax.f32 %v1401, 0.0
    %v1408 = vmul.f32 %v1402, %v1304
    %v1409 = vmul.f32 %v1403, %v1308
    %v1410 = vmul.f32 %v1404, %v1312
    %v1411 = vmul.f32 %v1405, %v1316
    %v1412 = vmul.f32 %v1406, %v1320
    %v1413 = vmul.f32 %v1407, %v1324
    %s1414 = smul.u32 4, 2
    %s1415 = smul.u32 %s1414, 48
    %s1416 = smul.u32 %s1415, 1
    %s1417 = sshll.u32 %s1416, 4
    %1418 = dma.done [#allocation3], %s1417
    %v1419 = vrot.slane %v1408, 7
    %v1420 = vrot.slane %v1409, 7
    %v1421 = vrot.slane %v1410, 7
    %v1422 = vrot.slane %v1411, 7
    %v1423 = vrot.slane %v1412, 7
    %v1424 = vrot.slane %v1413, 7
    %v1425 = vlaneseq
    %v1426 = vshrl.u32 %v1425, 7
    %vm1427 = vcmp.lt.s32.totalorder %v1426, 1
    %v1428 = vsel %vm1427, %v1423, %v1424
    %v1429 = vsel %vm1427, %v1422, %v1423
    %v1430 = vsel %vm1427, %v1421, %v1422
    %v1431 = vsel %vm1427, %v1420, %v1421
    %v1432 = vsel %vm1427, %v1419, %v1420
    %v1433 = vsel %vm1427, %v1424, %v1419
    %v1434 = vrot.slane %v1408, 1
    %v1435 = vrot.slane %v1409, 1
    %v1436 = vrot.slane %v1410, 1
    %v1437 = vrot.slane %v1411, 1
    %v1438 = vrot.slane %v1412, 1
    %v1439 = vrot.slane %v1413, 1
    %vm1440 = vcmp.lt.s32.totalorder %v1426, 7
    %v1441 = vsel %vm1440, %v1438, %v1439
    %v1442 = vsel %vm1440, %v1437, %v1438
    %v1443 = vsel %vm1440, %v1436, %v1437
    %v1444 = vsel %vm1440, %v1435, %v1436
    %v1445 = vsel %vm1440, %v1434, %v1435
    %v1446 = vsel %vm1440, %v1439, %v1434
    %v1447 = vpack.c.bf16 %v1432, %v1433
    %v1448 = vpack.c.bf16 %v1409, %v1408
    %v1449 = vpack.c.bf16 %v1444, %v1445
    %v1450 = vpack.c.bf16 %v1430, %v1431
    %v1451 = vpack.c.bf16 %v1411, %v1410
    %v1452 = vpack.c.bf16 %v1442, %v1443
    %v1453 = vpack.c.bf16 %v1428, %v1429
    %v1454 = vpack.c.bf16 %v1413, %v1412
    %v1455 = vpack.c.bf16 %v1446, %v1441
    %v1456 = vld [vmem:[#allocation2] sm:$0xf]
    %v1457 = vld [vmem:[#allocation2 + $0x4] sm:$0xf]
    %v1458 = vld [vmem:[#allocation2 + $0x8] sm:$0xf]
    %v1459 = vld [vmem:[#allocation2 + $0xc] sm:$0xf]
    %v1460 = vld [vmem:[#allocation2 + $0x10] sm:$0xf]
    %v1461 = vld [vmem:[#allocation2 + $0x14] sm:$0xf]
    %v1462 = vld [vmem:[#allocation2 + $0x18] sm:$0xf]
    %v1463 = vld [vmem:[#allocation2 + $0x1c] sm:$0xf]
    %v1464 = vld [vmem:[#allocation2 + $0x20] sm:$0xf]
    %v1465 = vld [vmem:[#allocation2 + $0x24] sm:$0xf]
    %v1466 = vld [vmem:[#allocation2 + $0x28] sm:$0xf]
    %v1467 = vld [vmem:[#allocation2 + $0x2c] sm:$0xf]
    %v1468 = vld [vmem:[#allocation2 + $0x30] sm:$0xf]
    %v1469 = vld [vmem:[#allocation2 + $0x34] sm:$0xf]
    %v1470 = vld [vmem:[#allocation2 + $0x38] sm:$0xf]
    %v1471 = vld [vmem:[#allocation2 + $0x3c] sm:$0xf]
    %v1472 = vld [vmem:[#allocation2 + $0x40] sm:$0xf]
    %v1473 = vld [vmem:[#allocation2 + $0x44] sm:$0xf]
    %v1474 = vld [vmem:[#allocation2 + $0x48] sm:$0xf]
    %v1475 = vld [vmem:[#allocation2 + $0x4c] sm:$0xf]
    %v1476 = vld [vmem:[#allocation2 + $0x50] sm:$0xf]
    %v1477 = vld [vmem:[#allocation2 + $0x54] sm:$0xf]
    %v1478 = vld [vmem:[#allocation2 + $0x58] sm:$0xf]
    %v1479 = vld [vmem:[#allocation2 + $0x5c] sm:$0xf]
    %v1480 = vld [vmem:[#allocation2 + $0x60] sm:$0xf]
    %v1481 = vld [vmem:[#allocation2 + $0x64] sm:$0xf]
    %v1482 = vld [vmem:[#allocation2 + $0x68] sm:$0xf]
    %v1483 = vld [vmem:[#allocation2 + $0x6c] sm:$0xf]
    %v1484 = vld [vmem:[#allocation2 + $0x70] sm:$0xf]
    %v1485 = vld [vmem:[#allocation2 + $0x74] sm:$0xf]
    %v1486 = vld [vmem:[#allocation2 + $0x78] sm:$0xf]
    %v1487 = vld [vmem:[#allocation2 + $0x7c] sm:$0xf]
    %v1488 = vld [vmem:[#allocation2 + $0x80] sm:$0xf]
    %v1489 = vld [vmem:[#allocation2 + $0x84] sm:$0xf]
    %v1490 = vld [vmem:[#allocation2 + $0x88] sm:$0xf]
    %v1491 = vld [vmem:[#allocation2 + $0x8c] sm:$0xf]
    %v1492 = vld [vmem:[#allocation2 + $0x90] sm:$0xf]
    %v1493 = vld [vmem:[#allocation2 + $0x94] sm:$0xf]
    %v1494 = vld [vmem:[#allocation2 + $0x98] sm:$0xf]
    %v1495 = vld [vmem:[#allocation2 + $0x9c] sm:$0xf]
    %v1496 = vld [vmem:[#allocation2 + $0xa0] sm:$0xf]
    %v1497 = vld [vmem:[#allocation2 + $0xa4] sm:$0xf]
    %v1498 = vld [vmem:[#allocation2 + $0xa8] sm:$0xf]
    %v1499 = vld [vmem:[#allocation2 + $0xac] sm:$0xf]
    %v1500 = vld [vmem:[#allocation2 + $0xb0] sm:$0xf]
    %v1501 = vld [vmem:[#allocation2 + $0xb4] sm:$0xf]
    %v1502 = vld [vmem:[#allocation2 + $0xb8] sm:$0xf]
    %v1503 = vld [vmem:[#allocation2 + $0xbc] sm:$0xf]
    %v1552 = vunpack.c.l.b16 %v1456
    %v1553 = vunpack.c.l.b16 %v1457
    %v1554 = vunpack.c.l.b16 %v1458
    %v1555 = vunpack.c.l.b16 %v1459
    %v1556 = vunpack.c.l.b16 %v1460
    %v1557 = vunpack.c.l.b16 %v1461
    %v1558 = vunpack.c.l.b16 %v1462
    %v1559 = vunpack.c.l.b16 %v1463
    %v1560 = vunpack.c.l.b16 %v1464
    %v1561 = vunpack.c.l.b16 %v1465
    %v1562 = vunpack.c.l.b16 %v1466
    %v1563 = vunpack.c.l.b16 %v1467
    %v1564 = vunpack.c.l.b16 %v1468
    %v1565 = vunpack.c.l.b16 %v1469
    %v1566 = vunpack.c.l.b16 %v1470
    %v1567 = vunpack.c.l.b16 %v1471
    %v1568 = vunpack.c.l.b16 %v1472
    %v1569 = vunpack.c.l.b16 %v1473
    %v1570 = vunpack.c.l.b16 %v1474
    %v1571 = vunpack.c.l.b16 %v1475
    %v1572 = vunpack.c.l.b16 %v1476
    %v1573 = vunpack.c.l.b16 %v1477
    %v1574 = vunpack.c.l.b16 %v1478
    %v1575 = vunpack.c.l.b16 %v1479
    %v1576 = vunpack.c.l.b16 %v1480
    %v1577 = vunpack.c.l.b16 %v1481
    %v1578 = vunpack.c.l.b16 %v1482
    %v1579 = vunpack.c.l.b16 %v1483
    %v1580 = vunpack.c.l.b16 %v1484
    %v1581 = vunpack.c.l.b16 %v1485
    %v1582 = vunpack.c.l.b16 %v1486
    %v1583 = vunpack.c.l.b16 %v1487
    %v1584 = vunpack.c.l.b16 %v1488
    %v1585 = vunpack.c.l.b16 %v1489
    %v1586 = vunpack.c.l.b16 %v1490
    %v1587 = vunpack.c.l.b16 %v1491
    %v1588 = vunpack.c.l.b16 %v1492
    %v1589 = vunpack.c.l.b16 %v1493
    %v1590 = vunpack.c.l.b16 %v1494
    %v1591 = vunpack.c.l.b16 %v1495
    %v1592 = vunpack.c.l.b16 %v1496
    %v1593 = vunpack.c.l.b16 %v1497
    %v1594 = vunpack.c.l.b16 %v1498
    %v1595 = vunpack.c.l.b16 %v1499
    %v1596 = vunpack.c.l.b16 %v1500
    %v1597 = vunpack.c.l.b16 %v1501
    %v1598 = vunpack.c.l.b16 %v1502
    %v1599 = vunpack.c.l.b16 %v1503
    %v1600 = vpack.c.b16 %v1553, %v1552
    %v1601 = vpack.c.b16 %v1555, %v1554
    %v1602 = vpack.c.b16 %v1557, %v1556
    %v1603 = vpack.c.b16 %v1559, %v1558
    %v1604 = vpack.c.b16 %v1561, %v1560
    %v1605 = vpack.c.b16 %v1563, %v1562
    %v1606 = vpack.c.b16 %v1565, %v1564
    %v1607 = vpack.c.b16 %v1567, %v1566
    %v1608 = vpack.c.b16 %v1569, %v1568
    %v1609 = vpack.c.b16 %v1571, %v1570
    %v1610 = vpack.c.b16 %v1573, %v1572
    %v1611 = vpack.c.b16 %v1575, %v1574
    %v1612 = vpack.c.b16 %v1577, %v1576
    %v1613 = vpack.c.b16 %v1579, %v1578
    %v1614 = vpack.c.b16 %v1581, %v1580
    %v1615 = vpack.c.b16 %v1583, %v1582
    %v1616 = vpack.c.b16 %v1585, %v1584
    %v1617 = vpack.c.b16 %v1587, %v1586
    %v1618 = vpack.c.b16 %v1589, %v1588
    %v1619 = vpack.c.b16 %v1591, %v1590
    %v1620 = vpack.c.b16 %v1593, %v1592
    %v1621 = vpack.c.b16 %v1595, %v1594
    %v1622 = vpack.c.b16 %v1597, %v1596
    %v1623 = vpack.c.b16 %v1599, %v1598
    %1648 = vmatpush.bf16.msra.mxu0 %v1607
    %1649 = vmatpush.bf16.msra.mxu0 %v1606
    %1650 = vmatpush.bf16.msra.mxu0 %v1605
    %1651 = vmatpush.bf16.msra.mxu0 %v1604
    %1652 = vmatpush.bf16.msra.mxu0 %v1603
    %1653 = vmatpush.bf16.msra.mxu0 %v1602
    %1654 = vmatpush.bf16.msra.mxu0 %v1601
    %1655 = vmatpush.bf16.msra.mxu0 %v1600
    %1656 = vmatmul.bf16.gmra.mxu0 %v1447
    %v1657 = vpop.f32.mrf.mxu0
    %v1658 = vadd.f32 0.0, %v1657
    %v1659 = vpop.f32.mrf.mxu0
    %v1660 = vadd.f32 0.0, %v1659
    %1661 = vmatmul.bf16.gmra.mxu0 %v1450
    %v1662 = vpop.f32.mrf.mxu0
    %v1663 = vadd.f32 0.0, %v1662
    %v1664 = vpop.f32.mrf.mxu0
    %v1665 = vadd.f32 0.0, %v1664
    %1666 = vmatmul.bf16.gmra.mxu0 %v1453
    %v1667 = vpop.f32.mrf.mxu0
    %v1668 = vadd.f32 0.0, %v1667
    %v1669 = vpop.f32.mrf.mxu0
    %v1670 = vadd.f32 0.0, %v1669
    %1671 = vdwg.mxu0
    %1672 = vmatpush.bf16.msra.mxu0 %v1615
    %1673 = vmatpush.bf16.msra.mxu0 %v1614
    %1674 = vmatpush.bf16.msra.mxu0 %v1613
    %1675 = vmatpush.bf16.msra.mxu0 %v1612
    %1676 = vmatpush.bf16.msra.mxu0 %v1611
    %1677 = vmatpush.bf16.msra.mxu0 %v1610
    %1678 = vmatpush.bf16.msra.mxu0 %v1609
    %1679 = vmatpush.bf16.msra.mxu0 %v1608
    %1680 = vmatmul.bf16.gmra.mxu0 %v1448
    %v1681 = vpop.f32.mrf.mxu0
    %v1682 = vadd.f32 %v1658, %v1681
    %v1683 = vpop.f32.mrf.mxu0
    %v1684 = vadd.f32 %v1660, %v1683
    %1685 = vmatmul.bf16.gmra.mxu0 %v1451
    %v1686 = vpop.f32.mrf.mxu0
    %v1687 = vadd.f32 %v1663, %v1686
    %v1688 = vpop.f32.mrf.mxu0
    %v1689 = vadd.f32 %v1665, %v1688
    %1690 = vmatmul.bf16.gmra.mxu0 %v1454
    %v1691 = vpop.f32.mrf.mxu0
    %v1692 = vadd.f32 %v1668, %v1691
    %v1693 = vpop.f32.mrf.mxu0
    %v1694 = vadd.f32 %v1670, %v1693
    %1695 = vdwg.mxu0
    %1696 = vmatpush.bf16.msra.mxu0 %v1623
    %1697 = vmatpush.bf16.msra.mxu0 %v1622
    %1698 = vmatpush.bf16.msra.mxu0 %v1621
    %1699 = vmatpush.bf16.msra.mxu0 %v1620
    %1700 = vmatpush.bf16.msra.mxu0 %v1619
    %1701 = vmatpush.bf16.msra.mxu0 %v1618
    %1702 = vmatpush.bf16.msra.mxu0 %v1617
    %1703 = vmatpush.bf16.msra.mxu0 %v1616
    %1704 = vmatmul.bf16.gmra.mxu0 %v1449
    %v1705 = vpop.f32.mrf.mxu0
    %v1706 = vadd.f32 %v1682, %v1705
    %v1707 = vpop.f32.mrf.mxu0
    %v1708 = vadd.f32 %v1684, %v1707
    %1709 = vmatmul.bf16.gmra.mxu0 %v1452
    %v1710 = vpop.f32.mrf.mxu0
    %v1711 = vadd.f32 %v1687, %v1710
    %v1712 = vpop.f32.mrf.mxu0
    %v1713 = vadd.f32 %v1689, %v1712
    %1714 = vmatmul.bf16.gmra.mxu0 %v1455
    %v1715 = vpop.f32.mrf.mxu0
    %v1716 = vadd.f32 %v1692, %v1715
    %v1717 = vpop.f32.mrf.mxu0
    %v1718 = vadd.f32 %v1694, %v1717
    %1719 = vdwg.mxu0
    %v1720 = vmul.f32 %v1706, %v1304
    %v1721 = vmul.f32 %v1708, %v1308
    %v1722 = vmul.f32 %v1711, %v1312
    %v1723 = vmul.f32 %v1713, %v1316
    %v1724 = vmul.f32 %v1716, %v1320
    %v1725 = vmul.f32 %v1718, %v1324
    %v1726 = vadd.f32 %v1720, %v1721
    %v1727 = vadd.f32 %v1726, %v1722
    %v1728 = vadd.f32 %v1727, %v1723
    %v1729 = vadd.f32 %v1728, %v1724
    %v1730 = vadd.f32 %v1729, %v1725
    %v1731 = vrot.slane %v1730, 4
    %v1732 = vadd.f32 %v1730, %v1731
    %v1733 = vrot.slane %v1732, 2
    %v1734 = vadd.f32 %v1732, %v1733
    %v1735 = vrot.slane %v1734, 1
    %v1736 = vadd.f32 %v1734, %v1735
    %v1737 = vmul.f32 %v1736, 0.03125
    %v1738 = vmul.f32 %v1720, %v1720
    %v1739 = vmul.f32 %v1721, %v1721
    %v1740 = vmul.f32 %v1722, %v1722
    %v1741 = vmul.f32 %v1723, %v1723
    %v1742 = vmul.f32 %v1724, %v1724
    %v1743 = vmul.f32 %v1725, %v1725
    %v1744 = vadd.f32 %v1738, %v1739
    %v1745 = vadd.f32 %v1744, %v1740
    %v1746 = vadd.f32 %v1745, %v1741
    %v1747 = vadd.f32 %v1746, %v1742
    %v1748 = vadd.f32 %v1747, %v1743
    %v1749 = vrot.slane %v1748, 4
    %v1750 = vadd.f32 %v1748, %v1749
    %v1751 = vrot.slane %v1750, 2
    %v1752 = vadd.f32 %v1750, %v1751
    %v1753 = vrot.slane %v1752, 1
    %v1754 = vadd.f32 %v1752, %v1753
    %v1755 = vmul.f32 %v1754, 0.03125
    %v1756 = vmul.f32 %v1737, %v1737
    %v1757 = vsub.f32 %v1755, %v1756
    %v1758 = vmax.f32 %v1757, 0.0
    %v1759 = vsub.f32 %v1720, %v1737
    %v1760 = vsub.f32 %v1721, %v1737
    %v1761 = vsub.f32 %v1722, %v1737
    %v1762 = vsub.f32 %v1723, %v1737
    %v1763 = vsub.f32 %v1724, %v1737
    %v1764 = vsub.f32 %v1725, %v1737
    %v1765 = vadd.f32 %v1758, 1e-05
    %v1766 = vrsqrt.pop %v1765
    %v1767 = vmul.f32 %v1766, %v1765
    %v1768 = vmul.f32 %v1767, %v1766
    %v1769 = vmul.f32 0.5, %v1768
    %v1770 = vsub.f32 1.5, %v1769
    %v1771 = vmul.f32 %v1766, %v1770
    %vm1772 = vweird.f32 %v1765
    %vm1773 = vweird.f32 %v1766
    %vm1774 = vmor %vm1772, %vm1773
    %v1775 = vsel %vm1774, %v1766, %v1771
    %v1776 = vmul.f32 %v1759, %v1775
    %v1777 = vmul.f32 %v1760, %v1775
    %v1778 = vmul.f32 %v1761, %v1775
    %v1779 = vmul.f32 %v1762, %v1775
    %v1780 = vmul.f32 %v1763, %v1775
    %v1781 = vmul.f32 %v1764, %v1775
    %v1782 = vperm.slane %v72, 2
    %v1783 = vmul.f32 %v1776, %v1782
    %v1784 = vmul.f32 %v1777, %v1782
    %v1785 = vmul.f32 %v1778, %v1782
    %v1786 = vmul.f32 %v1779, %v1782
    %v1787 = vmul.f32 %v1780, %v1782
    %v1788 = vmul.f32 %v1781, %v1782
    %v1789 = vperm.slane %v72, 3
    %v1790 = vadd.f32 %v1783, %v1789
    %v1791 = vadd.f32 %v1784, %v1789
    %v1792 = vadd.f32 %v1785, %v1789
    %v1793 = vadd.f32 %v1786, %v1789
    %v1794 = vadd.f32 %v1787, %v1789
    %v1795 = vadd.f32 %v1788, %v1789
    %v1796 = vmax.f32 %v1790, 0.0
    %v1797 = vmax.f32 %v1791, 0.0
    %v1798 = vmax.f32 %v1792, 0.0
    %v1799 = vmax.f32 %v1793, 0.0
    %v1800 = vmax.f32 %v1794, 0.0
    %v1801 = vmax.f32 %v1795, 0.0
    %v1802 = vmul.f32 %v1796, %v1304
    %v1803 = vmul.f32 %v1797, %v1308
    %v1804 = vmul.f32 %v1798, %v1312
    %v1805 = vmul.f32 %v1799, %v1316
    %v1806 = vmul.f32 %v1800, %v1320
    %v1807 = vmul.f32 %v1801, %v1324
    %v1808 = vrot.slane %v1802, 7
    %v1809 = vrot.slane %v1803, 7
    %v1810 = vrot.slane %v1804, 7
    %v1811 = vrot.slane %v1805, 7
    %v1812 = vrot.slane %v1806, 7
    %v1813 = vrot.slane %v1807, 7
    %v1814 = vsel %vm1427, %v1812, %v1813
    %v1815 = vsel %vm1427, %v1811, %v1812
    %v1816 = vsel %vm1427, %v1810, %v1811
    %v1817 = vsel %vm1427, %v1809, %v1810
    %v1818 = vsel %vm1427, %v1808, %v1809
    %v1819 = vsel %vm1427, %v1813, %v1808
    %v1820 = vrot.slane %v1802, 1
    %v1821 = vrot.slane %v1803, 1
    %v1822 = vrot.slane %v1804, 1
    %v1823 = vrot.slane %v1805, 1
    %v1824 = vrot.slane %v1806, 1
    %v1825 = vrot.slane %v1807, 1
    %v1826 = vsel %vm1440, %v1824, %v1825
    %v1827 = vsel %vm1440, %v1823, %v1824
    %v1828 = vsel %vm1440, %v1822, %v1823
    %v1829 = vsel %vm1440, %v1821, %v1822
    %v1830 = vsel %vm1440, %v1820, %v1821
    %v1831 = vsel %vm1440, %v1825, %v1820
    %v1832 = vpack.c.bf16 %v1818, %v1819
    %v1833 = vpack.c.bf16 %v1803, %v1802
    %v1834 = vpack.c.bf16 %v1829, %v1830
    %v1835 = vpack.c.bf16 %v1816, %v1817
    %v1836 = vpack.c.bf16 %v1805, %v1804
    %v1837 = vpack.c.bf16 %v1827, %v1828
    %v1838 = vpack.c.bf16 %v1814, %v1815
    %v1839 = vpack.c.bf16 %v1807, %v1806
    %v1840 = vpack.c.bf16 %v1831, %v1826
    %s1841 = scalar_lea.vmem [#allocation2], 192
    %v1842 = vld [vmem:[%s1841] sm:$0xf]
    %v1843 = vld [vmem:[%s1841 + $0x4] sm:$0xf]
    %v1844 = vld [vmem:[%s1841 + $0x8] sm:$0xf]
    %v1845 = vld [vmem:[%s1841 + $0xc] sm:$0xf]
    %v1846 = vld [vmem:[%s1841 + $0x10] sm:$0xf]
    %v1847 = vld [vmem:[%s1841 + $0x14] sm:$0xf]
    %v1848 = vld [vmem:[%s1841 + $0x18] sm:$0xf]
    %v1849 = vld [vmem:[%s1841 + $0x1c] sm:$0xf]
    %v1850 = vld [vmem:[%s1841 + $0x20] sm:$0xf]
    %v1851 = vld [vmem:[%s1841 + $0x24] sm:$0xf]
    %v1852 = vld [vmem:[%s1841 + $0x28] sm:$0xf]
    %v1853 = vld [vmem:[%s1841 + $0x2c] sm:$0xf]
    %v1854 = vld [vmem:[%s1841 + $0x30] sm:$0xf]
    %v1855 = vld [vmem:[%s1841 + $0x34] sm:$0xf]
    %v1856 = vld [vmem:[%s1841 + $0x38] sm:$0xf]
    %v1857 = vld [vmem:[%s1841 + $0x3c] sm:$0xf]
    %v1858 = vld [vmem:[%s1841 + $0x40] sm:$0xf]
    %v1859 = vld [vmem:[%s1841 + $0x44] sm:$0xf]
    %v1860 = vld [vmem:[%s1841 + $0x48] sm:$0xf]
    %v1861 = vld [vmem:[%s1841 + $0x4c] sm:$0xf]
    %v1862 = vld [vmem:[%s1841 + $0x50] sm:$0xf]
    %v1863 = vld [vmem:[%s1841 + $0x54] sm:$0xf]
    %v1864 = vld [vmem:[%s1841 + $0x58] sm:$0xf]
    %v1865 = vld [vmem:[%s1841 + $0x5c] sm:$0xf]
    %v1866 = vld [vmem:[%s1841 + $0x60] sm:$0xf]
    %v1867 = vld [vmem:[%s1841 + $0x64] sm:$0xf]
    %v1868 = vld [vmem:[%s1841 + $0x68] sm:$0xf]
    %v1869 = vld [vmem:[%s1841 + $0x6c] sm:$0xf]
    %v1870 = vld [vmem:[%s1841 + $0x70] sm:$0xf]
    %v1871 = vld [vmem:[%s1841 + $0x74] sm:$0xf]
    %v1872 = vld [vmem:[%s1841 + $0x78] sm:$0xf]
    %v1873 = vld [vmem:[%s1841 + $0x7c] sm:$0xf]
    %v1874 = vld [vmem:[%s1841 + $0x80] sm:$0xf]
    %v1875 = vld [vmem:[%s1841 + $0x84] sm:$0xf]
    %v1876 = vld [vmem:[%s1841 + $0x88] sm:$0xf]
    %v1877 = vld [vmem:[%s1841 + $0x8c] sm:$0xf]
    %v1878 = vld [vmem:[%s1841 + $0x90] sm:$0xf]
    %v1879 = vld [vmem:[%s1841 + $0x94] sm:$0xf]
    %v1880 = vld [vmem:[%s1841 + $0x98] sm:$0xf]
    %v1881 = vld [vmem:[%s1841 + $0x9c] sm:$0xf]
    %v1882 = vld [vmem:[%s1841 + $0xa0] sm:$0xf]
    %v1883 = vld [vmem:[%s1841 + $0xa4] sm:$0xf]
    %v1884 = vld [vmem:[%s1841 + $0xa8] sm:$0xf]
    %v1885 = vld [vmem:[%s1841 + $0xac] sm:$0xf]
    %v1886 = vld [vmem:[%s1841 + $0xb0] sm:$0xf]
    %v1887 = vld [vmem:[%s1841 + $0xb4] sm:$0xf]
    %v1888 = vld [vmem:[%s1841 + $0xb8] sm:$0xf]
    %v1889 = vld [vmem:[%s1841 + $0xbc] sm:$0xf]
    %v1938 = vunpack.c.l.b16 %v1842
    %v1939 = vunpack.c.l.b16 %v1843
    %v1940 = vunpack.c.l.b16 %v1844
    %v1941 = vunpack.c.l.b16 %v1845
    %v1942 = vunpack.c.l.b16 %v1846
    %v1943 = vunpack.c.l.b16 %v1847
    %v1944 = vunpack.c.l.b16 %v1848
    %v1945 = vunpack.c.l.b16 %v1849
    %v1946 = vunpack.c.l.b16 %v1850
    %v1947 = vunpack.c.l.b16 %v1851
    %v1948 = vunpack.c.l.b16 %v1852
    %v1949 = vunpack.c.l.b16 %v1853
    %v1950 = vunpack.c.l.b16 %v1854
    %v1951 = vunpack.c.l.b16 %v1855
    %v1952 = vunpack.c.l.b16 %v1856
    %v1953 = vunpack.c.l.b16 %v1857
    %v1954 = vunpack.c.l.b16 %v1858
    %v1955 = vunpack.c.l.b16 %v1859
    %v1956 = vunpack.c.l.b16 %v1860
    %v1957 = vunpack.c.l.b16 %v1861
    %v1958 = vunpack.c.l.b16 %v1862
    %v1959 = vunpack.c.l.b16 %v1863
    %v1960 = vunpack.c.l.b16 %v1864
    %v1961 = vunpack.c.l.b16 %v1865
    %v1962 = vunpack.c.l.b16 %v1866
    %v1963 = vunpack.c.l.b16 %v1867
    %v1964 = vunpack.c.l.b16 %v1868
    %v1965 = vunpack.c.l.b16 %v1869
    %v1966 = vunpack.c.l.b16 %v1870
    %v1967 = vunpack.c.l.b16 %v1871
    %v1968 = vunpack.c.l.b16 %v1872
    %v1969 = vunpack.c.l.b16 %v1873
    %v1970 = vunpack.c.l.b16 %v1874
    %v1971 = vunpack.c.l.b16 %v1875
    %v1972 = vunpack.c.l.b16 %v1876
    %v1973 = vunpack.c.l.b16 %v1877
    %v1974 = vunpack.c.l.b16 %v1878
    %v1975 = vunpack.c.l.b16 %v1879
    %v1976 = vunpack.c.l.b16 %v1880
    %v1977 = vunpack.c.l.b16 %v1881
    %v1978 = vunpack.c.l.b16 %v1882
    %v1979 = vunpack.c.l.b16 %v1883
    %v1980 = vunpack.c.l.b16 %v1884
    %v1981 = vunpack.c.l.b16 %v1885
    %v1982 = vunpack.c.l.b16 %v1886
    %v1983 = vunpack.c.l.b16 %v1887
    %v1984 = vunpack.c.l.b16 %v1888
    %v1985 = vunpack.c.l.b16 %v1889
    %v1986 = vpack.c.b16 %v1939, %v1938
    %v1987 = vpack.c.b16 %v1941, %v1940
    %v1988 = vpack.c.b16 %v1943, %v1942
    %v1989 = vpack.c.b16 %v1945, %v1944
    %v1990 = vpack.c.b16 %v1947, %v1946
    %v1991 = vpack.c.b16 %v1949, %v1948
    %v1992 = vpack.c.b16 %v1951, %v1950
    %v1993 = vpack.c.b16 %v1953, %v1952
    %v1994 = vpack.c.b16 %v1955, %v1954
    %v1995 = vpack.c.b16 %v1957, %v1956
    %v1996 = vpack.c.b16 %v1959, %v1958
    %v1997 = vpack.c.b16 %v1961, %v1960
    %v1998 = vpack.c.b16 %v1963, %v1962
    %v1999 = vpack.c.b16 %v1965, %v1964
    %v2000 = vpack.c.b16 %v1967, %v1966
    %v2001 = vpack.c.b16 %v1969, %v1968
    %v2002 = vpack.c.b16 %v1971, %v1970
    %v2003 = vpack.c.b16 %v1973, %v1972
    %v2004 = vpack.c.b16 %v1975, %v1974
    %v2005 = vpack.c.b16 %v1977, %v1976
    %v2006 = vpack.c.b16 %v1979, %v1978
    %v2007 = vpack.c.b16 %v1981, %v1980
    %v2008 = vpack.c.b16 %v1983, %v1982
    %v2009 = vpack.c.b16 %v1985, %v1984
    %2034 = vmatpush.bf16.msra.mxu0 %v1993
    %2035 = vmatpush.bf16.msra.mxu0 %v1992
    %2036 = vmatpush.bf16.msra.mxu0 %v1991
    %2037 = vmatpush.bf16.msra.mxu0 %v1990
    %2038 = vmatpush.bf16.msra.mxu0 %v1989
    %2039 = vmatpush.bf16.msra.mxu0 %v1988
    %2040 = vmatpush.bf16.msra.mxu0 %v1987
    %2041 = vmatpush.bf16.msra.mxu0 %v1986
    %2042 = vmatmul.bf16.gmra.mxu0 %v1832
    %v2043 = vpop.f32.mrf.mxu0
    %v2044 = vadd.f32 0.0, %v2043
    %v2045 = vpop.f32.mrf.mxu0
    %v2046 = vadd.f32 0.0, %v2045
    %2047 = vmatmul.bf16.gmra.mxu0 %v1835
    %v2048 = vpop.f32.mrf.mxu0
    %v2049 = vadd.f32 0.0, %v2048
    %v2050 = vpop.f32.mrf.mxu0
    %v2051 = vadd.f32 0.0, %v2050
    %2052 = vmatmul.bf16.gmra.mxu0 %v1838
    %v2053 = vpop.f32.mrf.mxu0
    %v2054 = vadd.f32 0.0, %v2053
    %v2055 = vpop.f32.mrf.mxu0
    %v2056 = vadd.f32 0.0, %v2055
    %2057 = vdwg.mxu0
    %2058 = vmatpush.bf16.msra.mxu0 %v2001
    %2059 = vmatpush.bf16.msra.mxu0 %v2000
    %2060 = vmatpush.bf16.msra.mxu0 %v1999
    %2061 = vmatpush.bf16.msra.mxu0 %v1998
    %2062 = vmatpush.bf16.msra.mxu0 %v1997
    %2063 = vmatpush.bf16.msra.mxu0 %v1996
    %2064 = vmatpush.bf16.msra.mxu0 %v1995
    %2065 = vmatpush.bf16.msra.mxu0 %v1994
    %2066 = vmatmul.bf16.gmra.mxu0 %v1833
    %v2067 = vpop.f32.mrf.mxu0
    %v2068 = vadd.f32 %v2044, %v2067
    %v2069 = vpop.f32.mrf.mxu0
    %v2070 = vadd.f32 %v2046, %v2069
    %2071 = vmatmul.bf16.gmra.mxu0 %v1836
    %v2072 = vpop.f32.mrf.mxu0
    %v2073 = vadd.f32 %v2049, %v2072
    %v2074 = vpop.f32.mrf.mxu0
    %v2075 = vadd.f32 %v2051, %v2074
    %2076 = vmatmul.bf16.gmra.mxu0 %v1839
    %v2077 = vpop.f32.mrf.mxu0
    %v2078 = vadd.f32 %v2054, %v2077
    %v2079 = vpop.f32.mrf.mxu0
    %v2080 = vadd.f32 %v2056, %v2079
    %2081 = vdwg.mxu0
    %2082 = vmatpush.bf16.msra.mxu0 %v2009
    %2083 = vmatpush.bf16.msra.mxu0 %v2008
    %2084 = vmatpush.bf16.msra.mxu0 %v2007
    %2085 = vmatpush.bf16.msra.mxu0 %v2006
    %2086 = vmatpush.bf16.msra.mxu0 %v2005
    %2087 = vmatpush.bf16.msra.mxu0 %v2004
    %2088 = vmatpush.bf16.msra.mxu0 %v2003
    %2089 = vmatpush.bf16.msra.mxu0 %v2002
    %2090 = vmatmul.bf16.gmra.mxu0 %v1834
    %v2091 = vpop.f32.mrf.mxu0
    %v2092 = vadd.f32 %v2068, %v2091
    %v2093 = vpop.f32.mrf.mxu0
    %v2094 = vadd.f32 %v2070, %v2093
    %2095 = vmatmul.bf16.gmra.mxu0 %v1837
    %v2096 = vpop.f32.mrf.mxu0
    %v2097 = vadd.f32 %v2073, %v2096
    %v2098 = vpop.f32.mrf.mxu0
    %v2099 = vadd.f32 %v2075, %v2098
    %2100 = vmatmul.bf16.gmra.mxu0 %v1840
    %v2101 = vpop.f32.mrf.mxu0
    %v2102 = vadd.f32 %v2078, %v2101
    %v2103 = vpop.f32.mrf.mxu0
    %v2104 = vadd.f32 %v2080, %v2103
    %2105 = vdwg.mxu0
    %v2106 = vmul.f32 %v2092, %v1304
    %v2107 = vmul.f32 %v2094, %v1308
    %v2108 = vmul.f32 %v2097, %v1312
    %v2109 = vmul.f32 %v2099, %v1316
    %v2110 = vmul.f32 %v2102, %v1320
    %v2111 = vmul.f32 %v2104, %v1324
    %v2112 = vadd.f32 %v2106, %v2107
    %v2113 = vadd.f32 %v2112, %v2108
    %v2114 = vadd.f32 %v2113, %v2109
    %v2115 = vadd.f32 %v2114, %v2110
    %v2116 = vadd.f32 %v2115, %v2111
    %v2117 = vrot.slane %v2116, 4
    %v2118 = vadd.f32 %v2116, %v2117
    %v2119 = vrot.slane %v2118, 2
    %v2120 = vadd.f32 %v2118, %v2119
    %v2121 = vrot.slane %v2120, 1
    %v2122 = vadd.f32 %v2120, %v2121
    %v2123 = vmul.f32 %v2122, 0.03125
    %v2124 = vmul.f32 %v2106, %v2106
    %v2125 = vmul.f32 %v2107, %v2107
    %v2126 = vmul.f32 %v2108, %v2108
    %v2127 = vmul.f32 %v2109, %v2109
    %v2128 = vmul.f32 %v2110, %v2110
    %v2129 = vmul.f32 %v2111, %v2111
    %v2130 = vadd.f32 %v2124, %v2125
    %v2131 = vadd.f32 %v2130, %v2126
    %v2132 = vadd.f32 %v2131, %v2127
    %v2133 = vadd.f32 %v2132, %v2128
    %v2134 = vadd.f32 %v2133, %v2129
    %v2135 = vrot.slane %v2134, 4
    %v2136 = vadd.f32 %v2134, %v2135
    %v2137 = vrot.slane %v2136, 2
    %v2138 = vadd.f32 %v2136, %v2137
    %v2139 = vrot.slane %v2138, 1
    %v2140 = vadd.f32 %v2138, %v2139
    %v2141 = vmul.f32 %v2140, 0.03125
    %v2142 = vmul.f32 %v2123, %v2123
    %v2143 = vsub.f32 %v2141, %v2142
    %v2144 = vmax.f32 %v2143, 0.0
    %v2145 = vsub.f32 %v2106, %v2123
    %v2146 = vsub.f32 %v2107, %v2123
    %v2147 = vsub.f32 %v2108, %v2123
    %v2148 = vsub.f32 %v2109, %v2123
    %v2149 = vsub.f32 %v2110, %v2123
    %v2150 = vsub.f32 %v2111, %v2123
    %v2151 = vadd.f32 %v2144, 1e-05
    %v2152 = vrsqrt.pop %v2151
    %v2153 = vmul.f32 %v2152, %v2151
    %v2154 = vmul.f32 %v2153, %v2152
    %v2155 = vmul.f32 0.5, %v2154
    %v2156 = vsub.f32 1.5, %v2155
    %v2157 = vmul.f32 %v2152, %v2156
    %vm2158 = vweird.f32 %v2151
    %vm2159 = vweird.f32 %v2152
    %vm2160 = vmor %vm2158, %vm2159
    %v2161 = vsel %vm2160, %v2152, %v2157
    %v2162 = vmul.f32 %v2145, %v2161
    %v2163 = vmul.f32 %v2146, %v2161
    %v2164 = vmul.f32 %v2147, %v2161
    %v2165 = vmul.f32 %v2148, %v2161
    %v2166 = vmul.f32 %v2149, %v2161
    %v2167 = vmul.f32 %v2150, %v2161
    %v2168 = vperm.slane %v72, 4
    %v2169 = vmul.f32 %v2162, %v2168
    %v2170 = vmul.f32 %v2163, %v2168
    %v2171 = vmul.f32 %v2164, %v2168
    %v2172 = vmul.f32 %v2165, %v2168
    %v2173 = vmul.f32 %v2166, %v2168
    %v2174 = vmul.f32 %v2167, %v2168
    %v2175 = vperm.slane %v72, 5
    %v2176 = vadd.f32 %v2169, %v2175
    %v2177 = vadd.f32 %v2170, %v2175
    %v2178 = vadd.f32 %v2171, %v2175
    %v2179 = vadd.f32 %v2172, %v2175
    %v2180 = vadd.f32 %v2173, %v2175
    %v2181 = vadd.f32 %v2174, %v2175
    %v2182 = vmax.f32 %v2176, 0.0
    %v2183 = vmax.f32 %v2177, 0.0
    %v2184 = vmax.f32 %v2178, 0.0
    %v2185 = vmax.f32 %v2179, 0.0
    %v2186 = vmax.f32 %v2180, 0.0
    %v2187 = vmax.f32 %v2181, 0.0
    %v2188 = vmul.f32 %v2182, %v1304
    %v2189 = vmul.f32 %v2183, %v1308
    %v2190 = vmul.f32 %v2184, %v1312
    %v2191 = vmul.f32 %v2185, %v1316
    %v2192 = vmul.f32 %v2186, %v1320
    %v2193 = vmul.f32 %v2187, %v1324
    %v2194 = vrot.slane %v2188, 7
    %v2195 = vrot.slane %v2189, 7
    %v2196 = vrot.slane %v2190, 7
    %v2197 = vrot.slane %v2191, 7
    %v2198 = vrot.slane %v2192, 7
    %v2199 = vrot.slane %v2193, 7
    %v2200 = vsel %vm1427, %v2198, %v2199
    %v2201 = vsel %vm1427, %v2197, %v2198
    %v2202 = vsel %vm1427, %v2196, %v2197
    %v2203 = vsel %vm1427, %v2195, %v2196
    %v2204 = vsel %vm1427, %v2194, %v2195
    %v2205 = vsel %vm1427, %v2199, %v2194
    %v2206 = vrot.slane %v2188, 1
    %v2207 = vrot.slane %v2189, 1
    %v2208 = vrot.slane %v2190, 1
    %v2209 = vrot.slane %v2191, 1
    %v2210 = vrot.slane %v2192, 1
    %v2211 = vrot.slane %v2193, 1
    %v2212 = vsel %vm1440, %v2210, %v2211
    %v2213 = vsel %vm1440, %v2209, %v2210
    %v2214 = vsel %vm1440, %v2208, %v2209
    %v2215 = vsel %vm1440, %v2207, %v2208
    %v2216 = vsel %vm1440, %v2206, %v2207
    %v2217 = vsel %vm1440, %v2211, %v2206
    %v2218 = vpack.c.bf16 %v2204, %v2205
    %v2219 = vpack.c.bf16 %v2189, %v2188
    %v2220 = vpack.c.bf16 %v2215, %v2216
    %v2221 = vpack.c.bf16 %v2202, %v2203
    %v2222 = vpack.c.bf16 %v2191, %v2190
    %v2223 = vpack.c.bf16 %v2213, %v2214
    %v2224 = vpack.c.bf16 %v2200, %v2201
    %v2225 = vpack.c.bf16 %v2193, %v2192
    %v2226 = vpack.c.bf16 %v2217, %v2212
    %v2227 = vld [vmem:[%s7] sm:$0xf]
    %v2228 = vld [vmem:[%s7 + $0x4] sm:$0xf]
    %v2229 = vld [vmem:[%s7 + $0x8] sm:$0xf]
    %v2230 = vld [vmem:[%s7 + $0xc] sm:$0xf]
    %v2231 = vld [vmem:[%s7 + $0x10] sm:$0xf]
    %v2232 = vld [vmem:[%s7 + $0x14] sm:$0xf]
    %v2233 = vld [vmem:[%s7 + $0x18] sm:$0xf]
    %v2234 = vld [vmem:[%s7 + $0x1c] sm:$0xf]
    %v2235 = vld [vmem:[%s7 + $0x20] sm:$0xf]
    %v2236 = vld [vmem:[%s7 + $0x24] sm:$0xf]
    %v2237 = vld [vmem:[%s7 + $0x28] sm:$0xf]
    %v2238 = vld [vmem:[%s7 + $0x2c] sm:$0xf]
    %v2239 = vld [vmem:[%s7 + $0x30] sm:$0xf]
    %v2240 = vld [vmem:[%s7 + $0x34] sm:$0xf]
    %v2241 = vld [vmem:[%s7 + $0x38] sm:$0xf]
    %v2242 = vld [vmem:[%s7 + $0x3c] sm:$0xf]
    %v2243 = vld [vmem:[%s7 + $0x40] sm:$0xf]
    %v2244 = vld [vmem:[%s7 + $0x44] sm:$0xf]
    %v2245 = vld [vmem:[%s7 + $0x48] sm:$0xf]
    %v2246 = vld [vmem:[%s7 + $0x4c] sm:$0xf]
    %v2247 = vld [vmem:[%s7 + $0x50] sm:$0xf]
    %v2248 = vld [vmem:[%s7 + $0x54] sm:$0xf]
    %v2249 = vld [vmem:[%s7 + $0x58] sm:$0xf]
    %v2250 = vld [vmem:[%s7 + $0x5c] sm:$0xf]
    %v2251 = vld [vmem:[%s7 + $0x60] sm:$0xf]
    %v2252 = vld [vmem:[%s7 + $0x64] sm:$0xf]
    %v2253 = vld [vmem:[%s7 + $0x68] sm:$0xf]
    %v2254 = vld [vmem:[%s7 + $0x6c] sm:$0xf]
    %v2255 = vld [vmem:[%s7 + $0x70] sm:$0xf]
    %v2256 = vld [vmem:[%s7 + $0x74] sm:$0xf]
    %v2257 = vld [vmem:[%s7 + $0x78] sm:$0xf]
    %v2258 = vld [vmem:[%s7 + $0x7c] sm:$0xf]
    %v2259 = vld [vmem:[%s7 + $0x80] sm:$0xf]
    %v2260 = vld [vmem:[%s7 + $0x84] sm:$0xf]
    %v2261 = vld [vmem:[%s7 + $0x88] sm:$0xf]
    %v2262 = vld [vmem:[%s7 + $0x8c] sm:$0xf]
    %v2263 = vld [vmem:[%s7 + $0x90] sm:$0xf]
    %v2264 = vld [vmem:[%s7 + $0x94] sm:$0xf]
    %v2265 = vld [vmem:[%s7 + $0x98] sm:$0xf]
    %v2266 = vld [vmem:[%s7 + $0x9c] sm:$0xf]
    %v2267 = vld [vmem:[%s7 + $0xa0] sm:$0xf]
    %v2268 = vld [vmem:[%s7 + $0xa4] sm:$0xf]
    %v2269 = vld [vmem:[%s7 + $0xa8] sm:$0xf]
    %v2270 = vld [vmem:[%s7 + $0xac] sm:$0xf]
    %v2271 = vld [vmem:[%s7 + $0xb0] sm:$0xf]
    %v2272 = vld [vmem:[%s7 + $0xb4] sm:$0xf]
    %v2273 = vld [vmem:[%s7 + $0xb8] sm:$0xf]
    %v2274 = vld [vmem:[%s7 + $0xbc] sm:$0xf]
    %v2275 = vperm.slane %v72, 6
    %v2324 = vunpack.c.l.b16 %v2227
    %v2325 = vunpack.c.l.b16 %v2228
    %v2326 = vunpack.c.l.b16 %v2229
    %v2327 = vunpack.c.l.b16 %v2230
    %v2328 = vunpack.c.l.b16 %v2231
    %v2329 = vunpack.c.l.b16 %v2232
    %v2330 = vunpack.c.l.b16 %v2233
    %v2331 = vunpack.c.l.b16 %v2234
    %v2332 = vunpack.c.l.b16 %v2235
    %v2333 = vunpack.c.l.b16 %v2236
    %v2334 = vunpack.c.l.b16 %v2237
    %v2335 = vunpack.c.l.b16 %v2238
    %v2336 = vunpack.c.l.b16 %v2239
    %v2337 = vunpack.c.l.b16 %v2240
    %v2338 = vunpack.c.l.b16 %v2241
    %v2339 = vunpack.c.l.b16 %v2242
    %v2340 = vunpack.c.l.b16 %v2243
    %v2341 = vunpack.c.l.b16 %v2244
    %v2342 = vunpack.c.l.b16 %v2245
    %v2343 = vunpack.c.l.b16 %v2246
    %v2344 = vunpack.c.l.b16 %v2247
    %v2345 = vunpack.c.l.b16 %v2248
    %v2346 = vunpack.c.l.b16 %v2249
    %v2347 = vunpack.c.l.b16 %v2250
    %v2348 = vunpack.c.l.b16 %v2251
    %v2349 = vunpack.c.l.b16 %v2252
    %v2350 = vunpack.c.l.b16 %v2253
    %v2351 = vunpack.c.l.b16 %v2254
    %v2352 = vunpack.c.l.b16 %v2255
    %v2353 = vunpack.c.l.b16 %v2256
    %v2354 = vunpack.c.l.b16 %v2257
    %v2355 = vunpack.c.l.b16 %v2258
    %v2356 = vunpack.c.l.b16 %v2259
    %v2357 = vunpack.c.l.b16 %v2260
    %v2358 = vunpack.c.l.b16 %v2261
    %v2359 = vunpack.c.l.b16 %v2262
    %v2360 = vunpack.c.l.b16 %v2263
    %v2361 = vunpack.c.l.b16 %v2264
    %v2362 = vunpack.c.l.b16 %v2265
    %v2363 = vunpack.c.l.b16 %v2266
    %v2364 = vunpack.c.l.b16 %v2267
    %v2365 = vunpack.c.l.b16 %v2268
    %v2366 = vunpack.c.l.b16 %v2269
    %v2367 = vunpack.c.l.b16 %v2270
    %v2368 = vunpack.c.l.b16 %v2271
    %v2369 = vunpack.c.l.b16 %v2272
    %v2370 = vunpack.c.l.b16 %v2273
    %v2371 = vunpack.c.l.b16 %v2274
    %v2372 = vpack.c.b16 %v2325, %v2324
    %v2373 = vpack.c.b16 %v2327, %v2326
    %v2374 = vpack.c.b16 %v2329, %v2328
    %v2375 = vpack.c.b16 %v2331, %v2330
    %v2376 = vpack.c.b16 %v2333, %v2332
    %v2377 = vpack.c.b16 %v2335, %v2334
    %v2378 = vpack.c.b16 %v2337, %v2336
    %v2379 = vpack.c.b16 %v2339, %v2338
    %v2380 = vpack.c.b16 %v2341, %v2340
    %v2381 = vpack.c.b16 %v2343, %v2342
    %v2382 = vpack.c.b16 %v2345, %v2344
    %v2383 = vpack.c.b16 %v2347, %v2346
    %v2384 = vpack.c.b16 %v2349, %v2348
    %v2385 = vpack.c.b16 %v2351, %v2350
    %v2386 = vpack.c.b16 %v2353, %v2352
    %v2387 = vpack.c.b16 %v2355, %v2354
    %v2388 = vpack.c.b16 %v2357, %v2356
    %v2389 = vpack.c.b16 %v2359, %v2358
    %v2390 = vpack.c.b16 %v2361, %v2360
    %v2391 = vpack.c.b16 %v2363, %v2362
    %v2392 = vpack.c.b16 %v2365, %v2364
    %v2393 = vpack.c.b16 %v2367, %v2366
    %v2394 = vpack.c.b16 %v2369, %v2368
    %v2395 = vpack.c.b16 %v2371, %v2370
    %2420 = vmatpush.bf16.msra.mxu0 %v2379
    %2421 = vmatpush.bf16.msra.mxu0 %v2378
    %2422 = vmatpush.bf16.msra.mxu0 %v2377
    %2423 = vmatpush.bf16.msra.mxu0 %v2376
    %2424 = vmatpush.bf16.msra.mxu0 %v2375
    %2425 = vmatpush.bf16.msra.mxu0 %v2374
    %2426 = vmatpush.bf16.msra.mxu0 %v2373
    %2427 = vmatpush.bf16.msra.mxu0 %v2372
    %2428 = vmatmul.bf16.gmra.mxu0 %v2218
    %v2429 = vpop.f32.mrf.mxu0
    %v2430 = vadd.f32 %v2275, %v2429
    %v2431 = vpop.f32.mrf.mxu0
    %v2432 = vadd.f32 %v2275, %v2431
    %2433 = vmatmul.bf16.gmra.mxu0 %v2221
    %v2434 = vpop.f32.mrf.mxu0
    %v2435 = vadd.f32 %v2275, %v2434
    %v2436 = vpop.f32.mrf.mxu0
    %v2437 = vadd.f32 %v2275, %v2436
    %2438 = vmatmul.bf16.gmra.mxu0 %v2224
    %v2439 = vpop.f32.mrf.mxu0
    %v2440 = vadd.f32 %v2275, %v2439
    %v2441 = vpop.f32.mrf.mxu0
    %v2442 = vadd.f32 %v2275, %v2441
    %2443 = vdwg.mxu0
    %2444 = vmatpush.bf16.msra.mxu0 %v2387
    %2445 = vmatpush.bf16.msra.mxu0 %v2386
    %2446 = vmatpush.bf16.msra.mxu0 %v2385
    %2447 = vmatpush.bf16.msra.mxu0 %v2384
    %2448 = vmatpush.bf16.msra.mxu0 %v2383
    %2449 = vmatpush.bf16.msra.mxu0 %v2382
    %2450 = vmatpush.bf16.msra.mxu0 %v2381
    %2451 = vmatpush.bf16.msra.mxu0 %v2380
    %2452 = vmatmul.bf16.gmra.mxu0 %v2219
    %v2453 = vpop.f32.mrf.mxu0
    %v2454 = vadd.f32 %v2430, %v2453
    %v2455 = vpop.f32.mrf.mxu0
    %v2456 = vadd.f32 %v2432, %v2455
    %2457 = vmatmul.bf16.gmra.mxu0 %v2222
    %v2458 = vpop.f32.mrf.mxu0
    %v2459 = vadd.f32 %v2435, %v2458
    %v2460 = vpop.f32.mrf.mxu0
    %v2461 = vadd.f32 %v2437, %v2460
    %2462 = vmatmul.bf16.gmra.mxu0 %v2225
    %v2463 = vpop.f32.mrf.mxu0
    %v2464 = vadd.f32 %v2440, %v2463
    %v2465 = vpop.f32.mrf.mxu0
    %v2466 = vadd.f32 %v2442, %v2465
    %2467 = vdwg.mxu0
    %2468 = vmatpush.bf16.msra.mxu0 %v2395
    %2469 = vmatpush.bf16.msra.mxu0 %v2394
    %2470 = vmatpush.bf16.msra.mxu0 %v2393
    %2471 = vmatpush.bf16.msra.mxu0 %v2392
    %2472 = vmatpush.bf16.msra.mxu0 %v2391
    %2473 = vmatpush.bf16.msra.mxu0 %v2390
    %2474 = vmatpush.bf16.msra.mxu0 %v2389
    %2475 = vmatpush.bf16.msra.mxu0 %v2388
    %2476 = vmatmul.bf16.gmra.mxu0 %v2220
    %v2477 = vpop.f32.mrf.mxu0
    %v2478 = vadd.f32 %v2454, %v2477
    %v2479 = vpop.f32.mrf.mxu0
    %v2480 = vadd.f32 %v2456, %v2479
    %2481 = vmatmul.bf16.gmra.mxu0 %v2223
    %v2482 = vpop.f32.mrf.mxu0
    %v2483 = vadd.f32 %v2459, %v2482
    %v2484 = vpop.f32.mrf.mxu0
    %v2485 = vadd.f32 %v2461, %v2484
    %2486 = vmatmul.bf16.gmra.mxu0 %v2226
    %v2487 = vpop.f32.mrf.mxu0
    %v2488 = vadd.f32 %v2464, %v2487
    %v2489 = vpop.f32.mrf.mxu0
    %v2490 = vadd.f32 %v2466, %v2489
    %2491 = vdwg.mxu0
    %2492 = vst.msk [vmem:[%s11] sm:$0xff] %vm1059, %v2478
    %2493 = vst.msk [vmem:[%s11 + $0x8] sm:$0xff] %vm1059, %v2480
    %2494 = vst.msk [vmem:[%s11 + $0x10] sm:$0xff] %vm1059, %v2483
    %2495 = vst.msk [vmem:[%s11 + $0x18] sm:$0xff] %vm1059, %v2485
    %2496 = vst.msk [vmem:[%s11 + $0x20] sm:$0xff] %vm1059, %v2488
    %2497 = vst.msk [vmem:[%s11 + $0x28] sm:$0xff] %vm1059, %v2490
    // Predicated region
    $region50: #{unet_forward.1} parent=1 // pred_check
      _
    $region51: #{unet_forward.1} parent=1 // pred_check_branch
      %2499 = sbr.rel (0) target = $region53
    $region52: #{unet_forward.1} parent=1 // pred_region
      _
    $region53: #{unet_forward.1} parent=1 // pred_fallthru
      _
    // Predicated region
    $region54: #{unet_forward.1} parent=1 // pred_check
      _
    $region55: #{unet_forward.1} parent=1 // pred_check_branch
      %2501 = sbr.rel (0) target = $region57
    $region56: #{unet_forward.1} parent=1 // pred_region
      _
    $region57: #{unet_forward.1} parent=1 // pred_fallthru
      _
    %2502 = vsyncpa [#allocation5], 1
  %2503 = vsyncmov [#allocation3]
  %s2504 = vpop.sfrf %2503
  %p2505 = scmp.eq.s32.totalorder %s2504, 0
  %p2506 = pneg %p2505
  %2508 = shalt.err (%p2506)

</llo_original>
